<compile_context>
chip_gen: v6e
topology: v6e:2x2x1
jax: 0.10.0
libtpu: 0.0.40
codegen_flags: <defaults>
</compile_context>

<pallas_src>
import functools

import numpy as np

import jax
import jax.numpy as jnp
from jax import lax
from jax.experimental import pallas as pl
from jax.experimental.pallas import tpu as pltpu


def _make_tap_masks(H, W, d, n_images):
    """(9, n_images*H*W) f32 validity masks for a 3x3 conv, dilation/pad d."""
    hh, ww = np.meshgrid(np.arange(H), np.arange(W), indexing="ij")
    masks = []
    for dy in range(3):
        for dx in range(3):
            oy, ox = (dy - 1) * d, (dx - 1) * d
            valid = ((hh + oy >= 0) & (hh + oy < H)
                     & (ww + ox >= 0) & (ww + ox < W))
            masks.append(valid.reshape(-1).astype(np.float32))
    m = np.stack(masks, axis=0)                      # (9, HW)
    return jnp.asarray(np.tile(m, (1, n_images)))    # (9, n_images*HW)


def _dilated_bottleneck_kernel(
    x_ref,      # (1, Cin_pad, L)    f32  input, batch*spatial flattened on lanes
    m1_ref,     # (9, L)             f32  conv1 tap-validity masks (dilation 2)
    m2_ref,     # (9, L)             f32  conv2 tap-validity masks (dilation 4)
    w1_ref,     # (Cout, 9*Cin_pad)  bf16 conv1 weights (BN1 scale folded in)
    b1_ref,     # (Cout, 1)          f32  BN1 folded bias
    w2_ref,     # (Cout, 9*Cout)     bf16 conv2 weights (BN2 scale folded in)
    b2_ref,     # (Cout, 1)          f32  BN2 folded bias
    wa1_ref,    # (Cout, Cmid)       f32  attention 1x1 conv (BN scale folded)
    ba1_ref,    # (Cmid, 1)          f32
    wa2_ref,    # (Cmid, 1)          f32  attention 1x1 conv -> 1 channel
    ba2_ref,    # (1, 1)             f32
    out_ref,    # (1, Cout, L)       f32  lane-dense output block
    col1_ref,   # scratch (9*Cin_pad, L) bf16  conv1 im2col matrix
    col2_ref,   # scratch (9*Cout,    L) bf16  conv2 im2col matrix
    *, width, dil1, dil2,
):
    L = out_ref.shape[2]

    def build_col(act, col_ref, mask_ref, d):
        # act: (c, L) f32.  Writes col_ref[tap*c:(tap+1)*c, :] = bf16(shifted
        # + masked act).  Shifts via static XLU lane rotates; wrapped / cross-
        # image positions are always tap-invalid, so the mask zeroes them.
        c = act.shape[0]
        for dy in range(3):
            for dx in range(3):
                tap = dy * 3 + dx
                off = (dy - 1) * d * width + (dx - 1) * d
                if off == 0:
                    piece = act                                  # center: mask all ones
                else:
                    shifted = pltpu.roll(act, shift=(-off) % L, axis=1)
                    piece = shifted * mask_ref[tap:tap + 1, :]
                col_ref[tap * c:(tap + 1) * c, :] = piece.astype(col_ref.dtype)

    # ---- conv1: 3x3, dilation=2, padding=2 (+ folded BN1 + ReLU) ------------
    x = x_ref[0]                                                 # (Cin_pad, L) f32
    build_col(x, col1_ref, m1_ref, dil1)
    y1 = jnp.dot(w1_ref[...], col1_ref[...],
                 preferred_element_type=jnp.float32)             # (Cout, L)
    y1 = jnp.maximum(y1 + b1_ref[...], 0.0)

    # ---- conv2: 3x3, dilation=4, padding=4 (+ folded BN2 + ReLU) ------------
    build_col(y1, col2_ref, m2_ref, dil2)
    y2 = jnp.dot(w2_ref[...], col2_ref[...],
                 preferred_element_type=jnp.float32)             # (Cout, L)
    y2 = jnp.maximum(y2 + b2_ref[...], 0.0)

    # ---- SpatialAttention: 1x1 -> BN -> ReLU -> 1x1 -> sigmoid, on the VPU --
    cmid = wa1_ref.shape[1]
    acc = None
    for j in range(cmid):
        row = jnp.sum(y2 * wa1_ref[:, j:j + 1], axis=0, keepdims=True)  # (1, L)
        row = jnp.maximum(row + ba1_ref[j:j + 1, :], 0.0)
        contrib = row * wa2_ref[j:j + 1, :]
        acc = contrib if acc is None else acc + contrib
    logits = acc + ba2_ref[...]                                  # (1, L)
    att = jax.nn.sigmoid(logits)

    out_ref[...] = (y2 * att)[None, :, :].astype(out_ref.dtype)


def dilated_bottleneck_pallas(x_nchw, params, *, images_per_step=None):
    """x_nchw: (N, Cin, H, W) float32 -> (N, Cout, H, W) float32."""
    (w1e, b1e, w2e, b2e, wa1e, ba1e, wa2, ba2) = params
    N, Cin, H, W = x_nchw.shape
    Cout = w1e.shape[-1]
    Cmid = wa1e.shape[-1]
    HW = H * W

    # Fold images into the lane axis.  Default: whole batch in one grid step.
    nb = N if images_per_step is None else images_per_step
    assert N % nb == 0
    G = N // nb
    L = nb * HW

    # Pad input channels to an 8-sublane multiple so conv1 col stores are
    # sublane-aligned; the extra K columns carry zero weights (free on MXU).
    cin_pad = -(-Cin // 8) * 8
    assert Cout % 8 == 0  # TODO(synk): pad Cout likewise for odd channel counts.

    x = x_nchw.astype(jnp.float32)
    if cin_pad != Cin:
        x = jnp.pad(x, ((0, 0), (0, cin_pad - Cin), (0, 0), (0, 0)))
    x = (x.reshape(G, nb, cin_pad, HW)
          .transpose(0, 2, 1, 3)
          .reshape(G, cin_pad, L))

    # Kernel-layout weights; matmul operands bf16, everything else f32.
    w1p = jnp.zeros((9, cin_pad, Cout), jnp.float32).at[:, :Cin, :].set(w1e)
    w1k = w1p.reshape(9 * cin_pad, Cout).T.astype(jnp.bfloat16)   # (Cout, 9*Cin_pad)
    w2k = w2e.reshape(9 * Cout, Cout).T.astype(jnp.bfloat16)      # (Cout, 9*Cout)
    b1k = b1e.reshape(Cout, 1).astype(jnp.float32)
    b2k = b2e.reshape(Cout, 1).astype(jnp.float32)
    wa1k = wa1e.astype(jnp.float32)                               # (Cout, Cmid)
    ba1k = ba1e.reshape(Cmid, 1).astype(jnp.float32)
    wa2k = wa2.reshape(Cmid, 1).astype(jnp.float32)
    ba2k = ba2.reshape(1, 1).astype(jnp.float32)

    m1 = _make_tap_masks(H, W, 2, nb)                             # (9, L)
    m2 = _make_tap_masks(H, W, 4, nb)                             # (9, L)

    kernel = functools.partial(
        _dilated_bottleneck_kernel, width=W, dil1=2, dil2=4)

    grid_spec = pltpu.PrefetchScalarGridSpec(
        num_scalar_prefetch=0,
        grid=(G,),
        in_specs=[
            pl.BlockSpec((1, cin_pad, L), lambda g: (g, 0, 0)),   # x
            pl.BlockSpec((9, L), lambda g: (0, 0)),               # masks d=2
            pl.BlockSpec((9, L), lambda g: (0, 0)),               # masks d=4
            pl.BlockSpec((Cout, 9 * cin_pad), lambda g: (0, 0)),  # w1
            pl.BlockSpec((Cout, 1), lambda g: (0, 0)),            # b1
            pl.BlockSpec((Cout, 9 * Cout), lambda g: (0, 0)),     # w2
            pl.BlockSpec((Cout, 1), lambda g: (0, 0)),            # b2
            pl.BlockSpec((Cout, Cmid), lambda g: (0, 0)),         # wa1
            pl.BlockSpec((Cmid, 1), lambda g: (0, 0)),            # ba1
            pl.BlockSpec((Cmid, 1), lambda g: (0, 0)),            # wa2
            pl.BlockSpec((1, 1), lambda g: (0, 0)),               # ba2
        ],
        out_specs=pl.BlockSpec((1, Cout, L), lambda g: (g, 0, 0)),
        scratch_shapes=[
            pltpu.VMEM((9 * cin_pad, L), jnp.bfloat16),
            pltpu.VMEM((9 * Cout, L), jnp.bfloat16),
        ],
    )

    out = pl.pallas_call(
        kernel,
        out_shape=jax.ShapeDtypeStruct((G, Cout, L), jnp.float32),
        grid_spec=grid_spec,
        compiler_params=pltpu.CompilerParams(
            dimension_semantics=("parallel",),
            vmem_limit_bytes=64 * 1024 * 1024,
        ),
    )(x, m1, m2, w1k, b1k, w2k, b2k, wa1k, ba1k, wa2k, ba2k)

    out = (out.reshape(G, Cout, nb, HW)
              .transpose(0, 2, 1, 3)
              .reshape(N, Cout, H, W))
    return out


def make_params(key, in_channels, out_channels):
    """Deterministic synthetic parameters; eval-mode BN folded into conv."""
    cmid = out_channels // 8
    eps = 1e-5
    ks = list(jax.random.split(key, 20))

    def u(k, shape, lo, hi):
        return jax.random.uniform(k, shape, jnp.float32, lo, hi)

    # conv1 (no bias) + BN1
    w1 = 0.2 * jax.random.normal(ks[0], (9, in_channels, out_channels), jnp.float32)
    g1 = u(ks[1], (out_channels,), 0.5, 1.5)
    be1 = 0.1 * jax.random.normal(ks[2], (out_channels,), jnp.float32)
    m1 = 0.1 * jax.random.normal(ks[3], (out_channels,), jnp.float32)
    v1 = u(ks[4], (out_channels,), 0.5, 1.5)
    s1 = g1 / jnp.sqrt(v1 + eps)
    w1e = w1 * s1[None, None, :]
    b1e = (be1 - s1 * m1)[None, :]

    # conv2 (no bias) + BN2
    w2 = 0.2 * jax.random.normal(ks[5], (9, out_channels, out_channels), jnp.float32)
    g2 = u(ks[6], (out_channels,), 0.5, 1.5)
    be2 = 0.1 * jax.random.normal(ks[7], (out_channels,), jnp.float32)
    m2 = 0.1 * jax.random.normal(ks[8], (out_channels,), jnp.float32)
    v2 = u(ks[9], (out_channels,), 0.5, 1.5)
    s2 = g2 / jnp.sqrt(v2 + eps)
    w2e = w2 * s2[None, None, :]
    b2e = (be2 - s2 * m2)[None, :]

    # attention: 1x1 conv (bias) + BN + ReLU + 1x1 conv (bias) + sigmoid
    wa1 = 0.3 * jax.random.normal(ks[10], (out_channels, cmid), jnp.float32)
    ba1 = 0.1 * jax.random.normal(ks[11], (cmid,), jnp.float32)
    ga = u(ks[12], (cmid,), 0.5, 1.5)
    bea = 0.1 * jax.random.normal(ks[13], (cmid,), jnp.float32)
    ma = 0.1 * jax.random.normal(ks[14], (cmid,), jnp.float32)
    va = u(ks[15], (cmid,), 0.5, 1.5)
    sa = ga / jnp.sqrt(va + eps)
    wa1e = wa1 * sa[None, :]
    ba1e = (sa * ba1 + bea - sa * ma)[None, :]

    wa2 = 0.3 * jax.random.normal(ks[16], (cmid, 1), jnp.float32)
    ba2 = 0.1 * jax.random.normal(ks[17], (1,), jnp.float32)[None, :]

    return (w1e, b1e, w2e, b2e, wa1e, ba1e, wa2, ba2)


def reference_forward(x_nchw, params):
    """Pure-JAX f32 reference (same folded params) for a correctness check."""
    (w1e, b1e, w2e, b2e, wa1e, ba1e, wa2, ba2) = params
    Cin = w1e.shape[1]
    Cout = w1e.shape[2]
    x = jnp.transpose(x_nchw, (0, 2, 3, 1)).astype(jnp.float32)  # NHWC
    dn = ("NHWC", "HWIO", "NHWC")

    w1_hwio = w1e.reshape(3, 3, Cin, Cout)
    y = lax.conv_general_dilated(
        x, w1_hwio, (1, 1), ((2, 2), (2, 2)), rhs_dilation=(2, 2),
        dimension_numbers=dn)
    y = jnp.maximum(y + b1e[0], 0.0)

    w2_hwio = w2e.reshape(3, 3, Cout, Cout)
    y = lax.conv_general_dilated(
        y, w2_hwio, (1, 1), ((4, 4), (4, 4)), rhs_dilation=(4, 4),
        dimension_numbers=dn)
    y2 = jnp.maximum(y + b2e[0], 0.0)

    a1 = jnp.maximum(jnp.einsum("nhwc,cd->nhwd", y2, wa1e) + ba1e[0], 0.0)
    att = jax.nn.sigmoid(jnp.einsum("nhwc,cd->nhwd", a1, wa2) + ba2[0])
    out = y2 * att
    return jnp.transpose(out, (0, 3, 1, 2))


if __name__ == "__main__":
    key = jax.random.PRNGKey(0)
    k_x, k_p = jax.random.split(key)

    N, Cin, H, W = 2, 4, 16, 16
    Cout = 16  # attention mid channels = Cout // 8 = 2

    x = jax.random.normal(k_x, (N, Cin, H, W), jnp.float32)
    params = make_params(k_p, Cin, Cout)

    run = jax.jit(functools.partial(dilated_bottleneck_pallas, params=params))
    out = run(x)
    out = jax.block_until_ready(out)

    ref = reference_forward(x, params)
    assert out.shape == (N, Cout, H, W), out.shape
    # bf16 MXU operands -> looser tolerance than the pure-f32 reference.
    assert jnp.allclose(out, ref, atol=5e-2, rtol=5e-2), (
        float(jnp.max(jnp.abs(out - ref))))

    print("KERNEL_OK")
</pallas_src>

<mosaic_0001>
module attributes {stable_mosaic.version = 11 : i64} {
  func.func @_dilated_bottleneck_kernel(%arg0: i32, %arg1: memref<1x8x512xf32, #tpu.memory_space<vmem>>, %arg2: memref<9x512xf32, #tpu.memory_space<vmem>>, %arg3: memref<9x512xf32, #tpu.memory_space<vmem>>, %arg4: memref<16x72xbf16, #tpu.memory_space<vmem>>, %arg5: memref<16x1xf32, #tpu.memory_space<vmem>>, %arg6: memref<16x144xbf16, #tpu.memory_space<vmem>>, %arg7: memref<16x1xf32, #tpu.memory_space<vmem>>, %arg8: memref<16x2xf32, #tpu.memory_space<vmem>>, %arg9: memref<2x1xf32, #tpu.memory_space<vmem>>, %arg10: memref<2x1xf32, #tpu.memory_space<vmem>>, %arg11: memref<1x1xf32, #tpu.memory_space<vmem>>, %arg12: memref<1x16x512xf32, #tpu.memory_space<vmem>>, %arg13: memref<72x512xbf16, #tpu.memory_space<vmem>>, %arg14: memref<144x512xbf16, #tpu.memory_space<vmem>>) attributes {dimension_semantics = [#tpu.dimension_semantics<parallel>], iteration_bounds = array<i64: 1>, scalar_prefetch = 0 : i64, scratch_operands = 2 : i64, tpu.core_type = #tpu.core_type<tc>, window_params = [{transform_indices = @transform_0, window_bounds = array<i64: 1, 8, 512>}, {pipeline_mode = #tpu.pipeline_mode<synchronous>, transform_indices = @transform_1, window_bounds = array<i64: 9, 512>}, {pipeline_mode = #tpu.pipeline_mode<synchronous>, transform_indices = @transform_2, window_bounds = array<i64: 9, 512>}, {pipeline_mode = #tpu.pipeline_mode<synchronous>, transform_indices = @transform_3, window_bounds = array<i64: 16, 72>}, {pipeline_mode = #tpu.pipeline_mode<synchronous>, transform_indices = @transform_4, window_bounds = array<i64: 16, 1>}, {pipeline_mode = #tpu.pipeline_mode<synchronous>, transform_indices = @transform_5, window_bounds = array<i64: 16, 144>}, {pipeline_mode = #tpu.pipeline_mode<synchronous>, transform_indices = @transform_6, window_bounds = array<i64: 16, 1>}, {pipeline_mode = #tpu.pipeline_mode<synchronous>, transform_indices = @transform_7, window_bounds = array<i64: 16, 2>}, {pipeline_mode = #tpu.pipeline_mode<synchronous>, transform_indices = @transform_8, window_bounds = array<i64: 2, 1>}, {pipeline_mode = #tpu.pipeline_mode<synchronous>, transform_indices = @transform_9, window_bounds = array<i64: 2, 1>}, {pipeline_mode = #tpu.pipeline_mode<synchronous>, transform_indices = @transform_10, window_bounds = array<i64: 1, 1>}, {transform_indices = @transform_11, window_bounds = array<i64: 1, 16, 512>}]} {
    %c0 = arith.constant 0 : index
    %c0_0 = arith.constant 0 : index
    %c0_1 = arith.constant 0 : index
    %0 = vector.load %arg1[%c0, %c0_0, %c0_1] : memref<1x8x512xf32, #tpu.memory_space<vmem>>, vector<1x8x512xf32>
    %1 = vector.shape_cast %0 : vector<1x8x512xf32> to vector<8x512xf32>
    %c34_i32 = arith.constant 34 : i32
    %2 = tpu.dynamic_rotate %1 by %c34_i32 dim 1 : vector<8x512xf32>, i32 -> vector<8x512xf32>
    %c0_2 = arith.constant 0 : index
    %c0_3 = arith.constant 0 : index
    %3 = vector.load %arg2[%c0_2, %c0_3] : memref<9x512xf32, #tpu.memory_space<vmem>>, vector<1x512xf32>
    %4 = vector.broadcast %3 : vector<1x512xf32> to vector<8x512xf32>
    %5 = arith.mulf %2, %4 : vector<8x512xf32>
    %6 = arith.truncf %5 : vector<8x512xf32> to vector<8x512xbf16>
    %c0_4 = arith.constant 0 : index
    %c0_5 = arith.constant 0 : index
    %7 = vector.load %arg13[%c0_4, %c0_5] : memref<72x512xbf16, #tpu.memory_space<vmem>>, vector<8x512xbf16>
    tpu.vector_store %arg13[%c0_4, %c0_5], %6 {strides = array<i32>} : memref<72x512xbf16, #tpu.memory_space<vmem>>, vector<8x512xbf16>,
    %c32_i32 = arith.constant 32 : i32
    %8 = tpu.dynamic_rotate %1 by %c32_i32 dim 1 : vector<8x512xf32>, i32 -> vector<8x512xf32>
    %c1 = arith.constant 1 : index
    %c0_6 = arith.constant 0 : index
    %9 = vector.load %arg2[%c1, %c0_6] : memref<9x512xf32, #tpu.memory_space<vmem>>, vector<1x512xf32>
    %10 = vector.broadcast %9 : vector<1x512xf32> to vector<8x512xf32>
    %11 = arith.mulf %8, %10 : vector<8x512xf32>
    %12 = arith.truncf %11 : vector<8x512xf32> to vector<8x512xbf16>
    %c8 = arith.constant 8 : index
    %c0_7 = arith.constant 0 : index
    %13 = vector.load %arg13[%c8, %c0_7] : memref<72x512xbf16, #tpu.memory_space<vmem>>, vector<8x512xbf16>
    tpu.vector_store %arg13[%c8, %c0_7], %12 {strides = array<i32>} : memref<72x512xbf16, #tpu.memory_space<vmem>>, vector<8x512xbf16>,
    %c30_i32 = arith.constant 30 : i32
    %14 = tpu.dynamic_rotate %1 by %c30_i32 dim 1 : vector<8x512xf32>, i32 -> vector<8x512xf32>
    %c2 = arith.constant 2 : index
    %c0_8 = arith.constant 0 : index
    %15 = vector.load %arg2[%c2, %c0_8] : memref<9x512xf32, #tpu.memory_space<vmem>>, vector<1x512xf32>
    %16 = vector.broadcast %15 : vector<1x512xf32> to vector<8x512xf32>
    %17 = arith.mulf %14, %16 : vector<8x512xf32>
    %18 = arith.truncf %17 : vector<8x512xf32> to vector<8x512xbf16>
    %c16 = arith.constant 16 : index
    %c0_9 = arith.constant 0 : index
    %19 = vector.load %arg13[%c16, %c0_9] : memref<72x512xbf16, #tpu.memory_space<vmem>>, vector<8x512xbf16>
    tpu.vector_store %arg13[%c16, %c0_9], %18 {strides = array<i32>} : memref<72x512xbf16, #tpu.memory_space<vmem>>, vector<8x512xbf16>,
    %c2_i32 = arith.constant 2 : i32
    %20 = tpu.dynamic_rotate %1 by %c2_i32 dim 1 : vector<8x512xf32>, i32 -> vector<8x512xf32>
    %c3 = arith.constant 3 : index
    %c0_10 = arith.constant 0 : index
    %21 = vector.load %arg2[%c3, %c0_10] : memref<9x512xf32, #tpu.memory_space<vmem>>, vector<1x512xf32>
    %22 = vector.broadcast %21 : vector<1x512xf32> to vector<8x512xf32>
    %23 = arith.mulf %20, %22 : vector<8x512xf32>
    %24 = arith.truncf %23 : vector<8x512xf32> to vector<8x512xbf16>
    %c24 = arith.constant 24 : index
    %c0_11 = arith.constant 0 : index
    %25 = vector.load %arg13[%c24, %c0_11] : memref<72x512xbf16, #tpu.memory_space<vmem>>, vector<8x512xbf16>
    tpu.vector_store %arg13[%c24, %c0_11], %24 {strides = array<i32>} : memref<72x512xbf16, #tpu.memory_space<vmem>>, vector<8x512xbf16>,
    %26 = arith.truncf %1 : vector<8x512xf32> to vector<8x512xbf16>
    %c32 = arith.constant 32 : index
    %c0_12 = arith.constant 0 : index
    %27 = vector.load %arg13[%c32, %c0_12] : memref<72x512xbf16, #tpu.memory_space<vmem>>, vector<8x512xbf16>
    tpu.vector_store %arg13[%c32, %c0_12], %26 {strides = array<i32>} : memref<72x512xbf16, #tpu.memory_space<vmem>>, vector<8x512xbf16>,
    %c510_i32 = arith.constant 510 : i32
    %28 = tpu.dynamic_rotate %1 by %c510_i32 dim 1 : vector<8x512xf32>, i32 -> vector<8x512xf32>
    %c5 = arith.constant 5 : index
    %c0_13 = arith.constant 0 : index
    %29 = vector.load %arg2[%c5, %c0_13] : memref<9x512xf32, #tpu.memory_space<vmem>>, vector<1x512xf32>
    %30 = vector.broadcast %29 : vector<1x512xf32> to vector<8x512xf32>
    %31 = arith.mulf %28, %30 : vector<8x512xf32>
    %32 = arith.truncf %31 : vector<8x512xf32> to vector<8x512xbf16>
    %c40 = arith.constant 40 : index
    %c0_14 = arith.constant 0 : index
    %33 = vector.load %arg13[%c40, %c0_14] : memref<72x512xbf16, #tpu.memory_space<vmem>>, vector<8x512xbf16>
    tpu.vector_store %arg13[%c40, %c0_14], %32 {strides = array<i32>} : memref<72x512xbf16, #tpu.memory_space<vmem>>, vector<8x512xbf16>,
    %c482_i32 = arith.constant 482 : i32
    %34 = tpu.dynamic_rotate %1 by %c482_i32 dim 1 : vector<8x512xf32>, i32 -> vector<8x512xf32>
    %c6 = arith.constant 6 : index
    %c0_15 = arith.constant 0 : index
    %35 = vector.load %arg2[%c6, %c0_15] : memref<9x512xf32, #tpu.memory_space<vmem>>, vector<1x512xf32>
    %36 = vector.broadcast %35 : vector<1x512xf32> to vector<8x512xf32>
    %37 = arith.mulf %34, %36 : vector<8x512xf32>
    %38 = arith.truncf %37 : vector<8x512xf32> to vector<8x512xbf16>
    %c48 = arith.constant 48 : index
    %c0_16 = arith.constant 0 : index
    %39 = vector.load %arg13[%c48, %c0_16] : memref<72x512xbf16, #tpu.memory_space<vmem>>, vector<8x512xbf16>
    tpu.vector_store %arg13[%c48, %c0_16], %38 {strides = array<i32>} : memref<72x512xbf16, #tpu.memory_space<vmem>>, vector<8x512xbf16>,
    %c480_i32 = arith.constant 480 : i32
    %40 = tpu.dynamic_rotate %1 by %c480_i32 dim 1 : vector<8x512xf32>, i32 -> vector<8x512xf32>
    %c7 = arith.constant 7 : index
    %c0_17 = arith.constant 0 : index
    %41 = vector.load %arg2[%c7, %c0_17] : memref<9x512xf32, #tpu.memory_space<vmem>>, vector<1x512xf32>
    %42 = vector.broadcast %41 : vector<1x512xf32> to vector<8x512xf32>
    %43 = arith.mulf %40, %42 : vector<8x512xf32>
    %44 = arith.truncf %43 : vector<8x512xf32> to vector<8x512xbf16>
    %c56 = arith.constant 56 : index
    %c0_18 = arith.constant 0 : index
    %45 = vector.load %arg13[%c56, %c0_18] : memref<72x512xbf16, #tpu.memory_space<vmem>>, vector<8x512xbf16>
    tpu.vector_store %arg13[%c56, %c0_18], %44 {strides = array<i32>} : memref<72x512xbf16, #tpu.memory_space<vmem>>, vector<8x512xbf16>,
    %c478_i32 = arith.constant 478 : i32
    %46 = tpu.dynamic_rotate %1 by %c478_i32 dim 1 : vector<8x512xf32>, i32 -> vector<8x512xf32>
    %c8_19 = arith.constant 8 : index
    %c0_20 = arith.constant 0 : index
    %47 = vector.load %arg2[%c8_19, %c0_20] : memref<9x512xf32, #tpu.memory_space<vmem>>, vector<1x512xf32>
    %48 = vector.broadcast %47 : vector<1x512xf32> to vector<8x512xf32>
    %49 = arith.mulf %46, %48 : vector<8x512xf32>
    %50 = arith.truncf %49 : vector<8x512xf32> to vector<8x512xbf16>
    %c64 = arith.constant 64 : index
    %c0_21 = arith.constant 0 : index
    %51 = vector.load %arg13[%c64, %c0_21] : memref<72x512xbf16, #tpu.memory_space<vmem>>, vector<8x512xbf16>
    tpu.vector_store %arg13[%c64, %c0_21], %50 {strides = array<i32>} : memref<72x512xbf16, #tpu.memory_space<vmem>>, vector<8x512xbf16>,
    %c0_22 = arith.constant 0 : index
    %c0_23 = arith.constant 0 : index
    %52 = vector.load %arg4[%c0_22, %c0_23] : memref<16x72xbf16, #tpu.memory_space<vmem>>, vector<16x72xbf16>
    %c0_24 = arith.constant 0 : index
    %c0_25 = arith.constant 0 : index
    %53 = vector.load %arg13[%c0_24, %c0_25] : memref<72x512xbf16, #tpu.memory_space<vmem>>, vector<72x512xbf16>
    %cst = arith.constant dense<0.000000e+00> : vector<16x512xf32>
    %54 = tpu.matmul %52, %53, %cst {dimension_numbers = #tpu.dot_dimension_numbers<[1], [0], [0], [1], [0, 0, 1, 1], [], []>} : vector<16x72xbf16>, vector<72x512xbf16>, vector<16x512xf32> -> vector<16x512xf32>
    %c0_26 = arith.constant 0 : index
    %c0_27 = arith.constant 0 : index
    %55 = vector.load %arg5[%c0_26, %c0_27] : memref<16x1xf32, #tpu.memory_space<vmem>>, vector<16x1xf32>
    %56 = vector.broadcast %55 : vector<16x1xf32> to vector<16x512xf32>
    %57 = arith.addf %54, %56 : vector<16x512xf32>
    %cst_28 = arith.constant 0.000000e+00 : f32
    %58 = vector.broadcast %cst_28 : f32 to vector<16x512xf32>
    %59 = arith.maximumf %57, %58 : vector<16x512xf32>
    %c68_i32 = arith.constant 68 : i32
    %60 = tpu.dynamic_rotate %59 by %c68_i32 dim 1 : vector<16x512xf32>, i32 -> vector<16x512xf32>
    %c0_29 = arith.constant 0 : index
    %c0_30 = arith.constant 0 : index
    %61 = vector.load %arg3[%c0_29, %c0_30] : memref<9x512xf32, #tpu.memory_space<vmem>>, vector<1x512xf32>
    %62 = vector.broadcast %61 : vector<1x512xf32> to vector<16x512xf32>
    %63 = arith.mulf %60, %62 : vector<16x512xf32>
    %64 = arith.truncf %63 : vector<16x512xf32> to vector<16x512xbf16>
    %c0_31 = arith.constant 0 : index
    %c0_32 = arith.constant 0 : index
    %65 = vector.load %arg14[%c0_31, %c0_32] : memref<144x512xbf16, #tpu.memory_space<vmem>>, vector<16x512xbf16>
    tpu.vector_store %arg14[%c0_31, %c0_32], %64 {strides = array<i32>} : memref<144x512xbf16, #tpu.memory_space<vmem>>, vector<16x512xbf16>,
    %c64_i32 = arith.constant 64 : i32
    %66 = tpu.dynamic_rotate %59 by %c64_i32 dim 1 : vector<16x512xf32>, i32 -> vector<16x512xf32>
    %c1_33 = arith.constant 1 : index
    %c0_34 = arith.constant 0 : index
    %67 = vector.load %arg3[%c1_33, %c0_34] : memref<9x512xf32, #tpu.memory_space<vmem>>, vector<1x512xf32>
    %68 = vector.broadcast %67 : vector<1x512xf32> to vector<16x512xf32>
    %69 = arith.mulf %66, %68 : vector<16x512xf32>
    %70 = arith.truncf %69 : vector<16x512xf32> to vector<16x512xbf16>
    %c16_35 = arith.constant 16 : index
    %c0_36 = arith.constant 0 : index
    %71 = vector.load %arg14[%c16_35, %c0_36] : memref<144x512xbf16, #tpu.memory_space<vmem>>, vector<16x512xbf16>
    tpu.vector_store %arg14[%c16_35, %c0_36], %70 {strides = array<i32>} : memref<144x512xbf16, #tpu.memory_space<vmem>>, vector<16x512xbf16>,
    %c60_i32 = arith.constant 60 : i32
    %72 = tpu.dynamic_rotate %59 by %c60_i32 dim 1 : vector<16x512xf32>, i32 -> vector<16x512xf32>
    %c2_37 = arith.constant 2 : index
    %c0_38 = arith.constant 0 : index
    %73 = vector.load %arg3[%c2_37, %c0_38] : memref<9x512xf32, #tpu.memory_space<vmem>>, vector<1x512xf32>
    %74 = vector.broadcast %73 : vector<1x512xf32> to vector<16x512xf32>
    %75 = arith.mulf %72, %74 : vector<16x512xf32>
    %76 = arith.truncf %75 : vector<16x512xf32> to vector<16x512xbf16>
    %c32_39 = arith.constant 32 : index
    %c0_40 = arith.constant 0 : index
    %77 = vector.load %arg14[%c32_39, %c0_40] : memref<144x512xbf16, #tpu.memory_space<vmem>>, vector<16x512xbf16>
    tpu.vector_store %arg14[%c32_39, %c0_40], %76 {strides = array<i32>} : memref<144x512xbf16, #tpu.memory_space<vmem>>, vector<16x512xbf16>,
    %c4_i32 = arith.constant 4 : i32
    %78 = tpu.dynamic_rotate %59 by %c4_i32 dim 1 : vector<16x512xf32>, i32 -> vector<16x512xf32>
    %c3_41 = arith.constant 3 : index
    %c0_42 = arith.constant 0 : index
    %79 = vector.load %arg3[%c3_41, %c0_42] : memref<9x512xf32, #tpu.memory_space<vmem>>, vector<1x512xf32>
    %80 = vector.broadcast %79 : vector<1x512xf32> to vector<16x512xf32>
    %81 = arith.mulf %78, %80 : vector<16x512xf32>
    %82 = arith.truncf %81 : vector<16x512xf32> to vector<16x512xbf16>
    %c48_43 = arith.constant 48 : index
    %c0_44 = arith.constant 0 : index
    %83 = vector.load %arg14[%c48_43, %c0_44] : memref<144x512xbf16, #tpu.memory_space<vmem>>, vector<16x512xbf16>
    tpu.vector_store %arg14[%c48_43, %c0_44], %82 {strides = array<i32>} : memref<144x512xbf16, #tpu.memory_space<vmem>>, vector<16x512xbf16>,
    %84 = arith.truncf %59 : vector<16x512xf32> to vector<16x512xbf16>
    %c64_45 = arith.constant 64 : index
    %c0_46 = arith.constant 0 : index
    %85 = vector.load %arg14[%c64_45, %c0_46] : memref<144x512xbf16, #tpu.memory_space<vmem>>, vector<16x512xbf16>
    tpu.vector_store %arg14[%c64_45, %c0_46], %84 {strides = array<i32>} : memref<144x512xbf16, #tpu.memory_space<vmem>>, vector<16x512xbf16>,
    %c508_i32 = arith.constant 508 : i32
    %86 = tpu.dynamic_rotate %59 by %c508_i32 dim 1 : vector<16x512xf32>, i32 -> vector<16x512xf32>
    %c5_47 = arith.constant 5 : index
    %c0_48 = arith.constant 0 : index
    %87 = vector.load %arg3[%c5_47, %c0_48] : memref<9x512xf32, #tpu.memory_space<vmem>>, vector<1x512xf32>
    %88 = vector.broadcast %87 : vector<1x512xf32> to vector<16x512xf32>
    %89 = arith.mulf %86, %88 : vector<16x512xf32>
    %90 = arith.truncf %89 : vector<16x512xf32> to vector<16x512xbf16>
    %c80 = arith.constant 80 : index
    %c0_49 = arith.constant 0 : index
    %91 = vector.load %arg14[%c80, %c0_49] : memref<144x512xbf16, #tpu.memory_space<vmem>>, vector<16x512xbf16>
    tpu.vector_store %arg14[%c80, %c0_49], %90 {strides = array<i32>} : memref<144x512xbf16, #tpu.memory_space<vmem>>, vector<16x512xbf16>,
    %c452_i32 = arith.constant 452 : i32
    %92 = tpu.dynamic_rotate %59 by %c452_i32 dim 1 : vector<16x512xf32>, i32 -> vector<16x512xf32>
    %c6_50 = arith.constant 6 : index
    %c0_51 = arith.constant 0 : index
    %93 = vector.load %arg3[%c6_50, %c0_51] : memref<9x512xf32, #tpu.memory_space<vmem>>, vector<1x512xf32>
    %94 = vector.broadcast %93 : vector<1x512xf32> to vector<16x512xf32>
    %95 = arith.mulf %92, %94 : vector<16x512xf32>
    %96 = arith.truncf %95 : vector<16x512xf32> to vector<16x512xbf16>
    %c96 = arith.constant 96 : index
    %c0_52 = arith.constant 0 : index
    %97 = vector.load %arg14[%c96, %c0_52] : memref<144x512xbf16, #tpu.memory_space<vmem>>, vector<16x512xbf16>
    tpu.vector_store %arg14[%c96, %c0_52], %96 {strides = array<i32>} : memref<144x512xbf16, #tpu.memory_space<vmem>>, vector<16x512xbf16>,
    %c448_i32 = arith.constant 448 : i32
    %98 = tpu.dynamic_rotate %59 by %c448_i32 dim 1 : vector<16x512xf32>, i32 -> vector<16x512xf32>
    %c7_53 = arith.constant 7 : index
    %c0_54 = arith.constant 0 : index
    %99 = vector.load %arg3[%c7_53, %c0_54] : memref<9x512xf32, #tpu.memory_space<vmem>>, vector<1x512xf32>
    %100 = vector.broadcast %99 : vector<1x512xf32> to vector<16x512xf32>
    %101 = arith.mulf %98, %100 : vector<16x512xf32>
    %102 = arith.truncf %101 : vector<16x512xf32> to vector<16x512xbf16>
    %c112 = arith.constant 112 : index
    %c0_55 = arith.constant 0 : index
    %103 = vector.load %arg14[%c112, %c0_55] : memref<144x512xbf16, #tpu.memory_space<vmem>>, vector<16x512xbf16>
    tpu.vector_store %arg14[%c112, %c0_55], %102 {strides = array<i32>} : memref<144x512xbf16, #tpu.memory_space<vmem>>, vector<16x512xbf16>,
    %c444_i32 = arith.constant 444 : i32
    %104 = tpu.dynamic_rotate %59 by %c444_i32 dim 1 : vector<16x512xf32>, i32 -> vector<16x512xf32>
    %c8_56 = arith.constant 8 : index
    %c0_57 = arith.constant 0 : index
    %105 = vector.load %arg3[%c8_56, %c0_57] : memref<9x512xf32, #tpu.memory_space<vmem>>, vector<1x512xf32>
    %106 = vector.broadcast %105 : vector<1x512xf32> to vector<16x512xf32>
    %107 = arith.mulf %104, %106 : vector<16x512xf32>
    %108 = arith.truncf %107 : vector<16x512xf32> to vector<16x512xbf16>
    %c128 = arith.constant 128 : index
    %c0_58 = arith.constant 0 : index
    %109 = vector.load %arg14[%c128, %c0_58] : memref<144x512xbf16, #tpu.memory_space<vmem>>, vector<16x512xbf16>
    tpu.vector_store %arg14[%c128, %c0_58], %108 {strides = array<i32>} : memref<144x512xbf16, #tpu.memory_space<vmem>>, vector<16x512xbf16>,
    %c0_59 = arith.constant 0 : index
    %c0_60 = arith.constant 0 : index
    %110 = vector.load %arg6[%c0_59, %c0_60] : memref<16x144xbf16, #tpu.memory_space<vmem>>, vector<16x144xbf16>
    %c0_61 = arith.constant 0 : index
    %c0_62 = arith.constant 0 : index
    %111 = vector.load %arg14[%c0_61, %c0_62] : memref<144x512xbf16, #tpu.memory_space<vmem>>, vector<144x512xbf16>
    %cst_63 = arith.constant dense<0.000000e+00> : vector<16x512xf32>
    %112 = tpu.matmul %110, %111, %cst_63 {dimension_numbers = #tpu.dot_dimension_numbers<[1], [0], [0], [1], [0, 0, 1, 1], [], []>} : vector<16x144xbf16>, vector<144x512xbf16>, vector<16x512xf32> -> vector<16x512xf32>
    %c0_64 = arith.constant 0 : index
    %c0_65 = arith.constant 0 : index
    %113 = vector.load %arg7[%c0_64, %c0_65] : memref<16x1xf32, #tpu.memory_space<vmem>>, vector<16x1xf32>
    %114 = vector.broadcast %113 : vector<16x1xf32> to vector<16x512xf32>
    %115 = arith.addf %112, %114 : vector<16x512xf32>
    %cst_66 = arith.constant 0.000000e+00 : f32
    %116 = vector.broadcast %cst_66 : f32 to vector<16x512xf32>
    %117 = arith.maximumf %115, %116 : vector<16x512xf32>
    %c0_67 = arith.constant 0 : index
    %c0_68 = arith.constant 0 : index
    %118 = vector.load %arg8[%c0_67, %c0_68] : memref<16x2xf32, #tpu.memory_space<vmem>>, vector<16x1xf32>
    %119 = vector.broadcast %118 : vector<16x1xf32> to vector<16x512xf32>
    %120 = arith.mulf %117, %119 : vector<16x512xf32>
    %cst_69 = arith.constant dense<0.000000e+00> : vector<512xf32>
    %121 = vector.multi_reduction <add>, %120, %cst_69 [0] : vector<16x512xf32> to vector<512xf32>
    %122 = vector.shape_cast %121 : vector<512xf32> to vector<1x512xf32>
    %c0_70 = arith.constant 0 : index
    %c0_71 = arith.constant 0 : index
    %123 = vector.load %arg9[%c0_70, %c0_71] : memref<2x1xf32, #tpu.memory_space<vmem>>, vector<1x1xf32>
    %124 = vector.broadcast %123 : vector<1x1xf32> to vector<1x512xf32>
    %125 = arith.addf %122, %124 : vector<1x512xf32>
    %cst_72 = arith.constant 0.000000e+00 : f32
    %126 = vector.broadcast %cst_72 : f32 to vector<1x512xf32>
    %127 = arith.maximumf %125, %126 : vector<1x512xf32>
    %c0_73 = arith.constant 0 : index
    %c0_74 = arith.constant 0 : index
    %128 = vector.load %arg10[%c0_73, %c0_74] : memref<2x1xf32, #tpu.memory_space<vmem>>, vector<1x1xf32>
    %129 = vector.broadcast %128 : vector<1x1xf32> to vector<1x512xf32>
    %130 = arith.mulf %127, %129 : vector<1x512xf32>
    %c0_75 = arith.constant 0 : index
    %c1_76 = arith.constant 1 : index
    %131 = vector.load %arg8[%c0_75, %c1_76] : memref<16x2xf32, #tpu.memory_space<vmem>>, vector<16x1xf32>
    %132 = vector.broadcast %131 : vector<16x1xf32> to vector<16x512xf32>
    %133 = arith.mulf %117, %132 : vector<16x512xf32>
    %cst_77 = arith.constant dense<0.000000e+00> : vector<512xf32>
    %134 = vector.multi_reduction <add>, %133, %cst_77 [0] : vector<16x512xf32> to vector<512xf32>
    %135 = vector.shape_cast %134 : vector<512xf32> to vector<1x512xf32>
    %c1_78 = arith.constant 1 : index
    %c0_79 = arith.constant 0 : index
    %136 = vector.load %arg9[%c1_78, %c0_79] : memref<2x1xf32, #tpu.memory_space<vmem>>, vector<1x1xf32>
    %137 = vector.broadcast %136 : vector<1x1xf32> to vector<1x512xf32>
    %138 = arith.addf %135, %137 : vector<1x512xf32>
    %cst_80 = arith.constant 0.000000e+00 : f32
    %139 = vector.broadcast %cst_80 : f32 to vector<1x512xf32>
    %140 = arith.maximumf %138, %139 : vector<1x512xf32>
    %c1_81 = arith.constant 1 : index
    %c0_82 = arith.constant 0 : index
    %141 = vector.load %arg10[%c1_81, %c0_82] : memref<2x1xf32, #tpu.memory_space<vmem>>, vector<1x1xf32>
    %142 = vector.broadcast %141 : vector<1x1xf32> to vector<1x512xf32>
    %143 = arith.mulf %140, %142 : vector<1x512xf32>
    %144 = arith.addf %130, %143 : vector<1x512xf32>
    %c0_83 = arith.constant 0 : index
    %c0_84 = arith.constant 0 : index
    %145 = vector.load %arg11[%c0_83, %c0_84] : memref<1x1xf32, #tpu.memory_space<vmem>>, vector<1x1xf32>
    %146 = vector.broadcast %145 : vector<1x1xf32> to vector<1x512xf32>
    %147 = arith.addf %144, %146 : vector<1x512xf32>
    %148 = arith.negf %147 : vector<1x512xf32>
    %149 = math.exp %148 : vector<1x512xf32>
    %cst_85 = arith.constant 1.000000e+00 : f32
    %150 = vector.broadcast %cst_85 : f32 to vector<1x512xf32>
    %151 = arith.addf %150, %149 : vector<1x512xf32>
    %152 = arith.divf %150, %151 : vector<1x512xf32>
    %153 = vector.broadcast %152 : vector<1x512xf32> to vector<16x512xf32>
    %154 = arith.mulf %117, %153 : vector<16x512xf32>
    %155 = vector.shape_cast %154 : vector<16x512xf32> to vector<1x16x512xf32>
    %c0_86 = arith.constant 0 : index
    %c0_87 = arith.constant 0 : index
    %c0_88 = arith.constant 0 : index
    %156 = vector.load %arg12[%c0_86, %c0_87, %c0_88] : memref<1x16x512xf32, #tpu.memory_space<vmem>>, vector<1x16x512xf32>
    tpu.vector_store %arg12[%c0_86, %c0_87, %c0_88], %155 {strides = array<i32>} : memref<1x16x512xf32, #tpu.memory_space<vmem>>, vector<1x16x512xf32>,
    return
  }
  func.func @transform_0(%arg0: i32) -> (i32, i32, i32) {
    %c0_i32 = arith.constant 0 : i32
    %c0_i32_0 = arith.constant 0 : i32
    %c0_i32_1 = arith.constant 0 : i32
    return %arg0, %c0_i32, %c0_i32_0 : i32, i32, i32
  }
  func.func @transform_1(%arg0: i32) -> (i32, i32) {
    %c0_i32 = arith.constant 0 : i32
    %c0_i32_0 = arith.constant 0 : i32
    %c0_i32_1 = arith.constant 0 : i32
    return %c0_i32, %c0_i32_0 : i32, i32
  }
  func.func @transform_2(%arg0: i32) -> (i32, i32) {
    %c0_i32 = arith.constant 0 : i32
    %c0_i32_0 = arith.constant 0 : i32
    %c0_i32_1 = arith.constant 0 : i32
    return %c0_i32, %c0_i32_0 : i32, i32
  }
  func.func @transform_3(%arg0: i32) -> (i32, i32) {
    %c0_i32 = arith.constant 0 : i32
    %c0_i32_0 = arith.constant 0 : i32
    %c0_i32_1 = arith.constant 0 : i32
    return %c0_i32, %c0_i32_0 : i32, i32
  }
  func.func @transform_4(%arg0: i32) -> (i32, i32) {
    %c0_i32 = arith.constant 0 : i32
    %c0_i32_0 = arith.constant 0 : i32
    %c0_i32_1 = arith.constant 0 : i32
    return %c0_i32, %c0_i32_0 : i32, i32
  }
  func.func @transform_5(%arg0: i32) -> (i32, i32) {
    %c0_i32 = arith.constant 0 : i32
    %c0_i32_0 = arith.constant 0 : i32
    %c0_i32_1 = arith.constant 0 : i32
    return %c0_i32, %c0_i32_0 : i32, i32
  }
  func.func @transform_6(%arg0: i32) -> (i32, i32) {
    %c0_i32 = arith.constant 0 : i32
    %c0_i32_0 = arith.constant 0 : i32
    %c0_i32_1 = arith.constant 0 : i32
    return %c0_i32, %c0_i32_0 : i32, i32
  }
  func.func @transform_7(%arg0: i32) -> (i32, i32) {
    %c0_i32 = arith.constant 0 : i32
    %c0_i32_0 = arith.constant 0 : i32
    %c0_i32_1 = arith.constant 0 : i32
    return %c0_i32, %c0_i32_0 : i32, i32
  }
  func.func @transform_8(%arg0: i32) -> (i32, i32) {
    %c0_i32 = arith.constant 0 : i32
    %c0_i32_0 = arith.constant 0 : i32
    %c0_i32_1 = arith.constant 0 : i32
    return %c0_i32, %c0_i32_0 : i32, i32
  }
  func.func @transform_9(%arg0: i32) -> (i32, i32) {
    %c0_i32 = arith.constant 0 : i32
    %c0_i32_0 = arith.constant 0 : i32
    %c0_i32_1 = arith.constant 0 : i32
    return %c0_i32, %c0_i32_0 : i32, i32
  }
  func.func @transform_10(%arg0: i32) -> (i32, i32) {
    %c0_i32 = arith.constant 0 : i32
    %c0_i32_0 = arith.constant 0 : i32
    %c0_i32_1 = arith.constant 0 : i32
    return %c0_i32, %c0_i32_0 : i32, i32
  }
  func.func @transform_11(%arg0: i32) -> (i32, i32, i32) {
    %c0_i32 = arith.constant 0 : i32
    %c0_i32_0 = arith.constant 0 : i32
    %c0_i32_1 = arith.constant 0 : i32
    return %arg0, %c0_i32, %c0_i32_0 : i32, i32, i32
  }
}

</mosaic_0001>

<llo_original>
// kernel: dilated_bottleneck_pallas.1
$region0: #{dilated_bottleneck_pallas.1}
  #allocation0 [shape = 'u32[]', space=smem, size = 0x4, offset = 0x4, fixed_abs, tag = 'smem constant byte address 0x4 - core index']
  #allocation1 [shape = 'u32[144,128]{1,0:T(1,128)}', space=vmem, size = 0x12000, scoped, tag = 'internal scratch']
  #allocation2 [shape = 'bf16[72,512]{1,0:T(8,128)(2,1)}', space=vmem, size = 0x12000, scoped, tag = 'scratch operand']
  #allocation3 [shape = 'bf16[144,512]{1,0:T(8,128)(2,1)}', space=vmem, size = 0x24000, scoped, tag = 'scratch operand']
  #allocation4 [shape = 'f32[1,1]{1,0:T(1,128)S(1)}', space=vmem, size = 0x200, scoped, tag = 'scoped memory for dilated_bottleneck_pallas.1']
  %s0 = inlined_call_operand.vmem [shape: f32[1,8,512], index: 0, kind: input, shape index: {}]
  %s1 = inlined_call_operand.vmem [shape: f32[9,512], index: 1, kind: input, shape index: {}]
  %s2 = inlined_call_operand.vmem [shape: f32[9,512], index: 2, kind: input, shape index: {}]
  %s3 = inlined_call_operand.vmem [shape: bf16[16,72], index: 3, kind: input, shape index: {}]
  %s4 = inlined_call_operand.vmem [shape: f32[16,1], index: 4, kind: input, shape index: {}]
  %s5 = inlined_call_operand.vmem [shape: bf16[16,144], index: 5, kind: input, shape index: {}]
  %s6 = inlined_call_operand.vmem [shape: f32[16,1], index: 6, kind: input, shape index: {}]
  %s7 = inlined_call_operand.vmem [shape: f32[16,2], index: 7, kind: input, shape index: {}]
  %s8 = inlined_call_operand.vmem [shape: f32[2,1], index: 8, kind: input, shape index: {}]
  %s9 = inlined_call_operand.vmem [shape: f32[2,1], index: 9, kind: input, shape index: {}]
  %s10 = inlined_call_operand.<no memory space> [shape: f32[1,1], index: 10, kind: input, shape index: {}]
  %s11 = inlined_call_operand.vmem [shape: f32[1,16,512], index: 11, kind: output, shape index: {}]
  %s12 = sld [smem:[#allocation0]]
  $region54: #{dilated_bottleneck_pallas.1} parent=0
    _
  %s14 = ssub.s32 1, %s12
  %s15 = scalar_select 0, %s14, %s12
  %v16 = vstv %s10
  %17 = vst [vmem:[#allocation4] sm:$0x1] %v16
  // Predicated region
  $region2: #{dilated_bottleneck_pallas.1} parent=0 // pred_check
    _
  $region3: #{dilated_bottleneck_pallas.1} parent=0 // pred_check_branch
    %19 = sbr.rel (0) target = $region5
  $region4: #{dilated_bottleneck_pallas.1} parent=0 // pred_region
    _
  $region5: #{dilated_bottleneck_pallas.1} parent=0 // pred_fallthru
    _
  // Predicated region
  $region6: #{dilated_bottleneck_pallas.1} parent=0 // pred_check
    _
  $region7: #{dilated_bottleneck_pallas.1} parent=0 // pred_check_branch
    %21 = sbr.rel (0) target = $region9
  $region8: #{dilated_bottleneck_pallas.1} parent=0 // pred_region
    _
  $region9: #{dilated_bottleneck_pallas.1} parent=0 // pred_fallthru
    _
  // Predicated region
  $region10: #{dilated_bottleneck_pallas.1} parent=0 // pred_check
    _
  $region11: #{dilated_bottleneck_pallas.1} parent=0 // pred_check_branch
    %23 = sbr.rel (0) target = $region13
  $region12: #{dilated_bottleneck_pallas.1} parent=0 // pred_region
    _
  $region13: #{dilated_bottleneck_pallas.1} parent=0 // pred_fallthru
    _
  // Predicated region
  $region14: #{dilated_bottleneck_pallas.1} parent=0 // pred_check
    _
  $region15: #{dilated_bottleneck_pallas.1} parent=0 // pred_check_branch
    %25 = sbr.rel (0) target = $region17
  $region16: #{dilated_bottleneck_pallas.1} parent=0 // pred_region
    _
  $region17: #{dilated_bottleneck_pallas.1} parent=0 // pred_fallthru
    _
  // Predicated region
  $region18: #{dilated_bottleneck_pallas.1} parent=0 // pred_check
    _
  $region19: #{dilated_bottleneck_pallas.1} parent=0 // pred_check_branch
    %27 = sbr.rel (0) target = $region21
  $region20: #{dilated_bottleneck_pallas.1} parent=0 // pred_region
    _
  $region21: #{dilated_bottleneck_pallas.1} parent=0 // pred_fallthru
    _
  // Predicated region
  $region22: #{dilated_bottleneck_pallas.1} parent=0 // pred_check
    _
  $region23: #{dilated_bottleneck_pallas.1} parent=0 // pred_check_branch
    %29 = sbr.rel (0) target = $region25
  $region24: #{dilated_bottleneck_pallas.1} parent=0 // pred_region
    _
  $region25: #{dilated_bottleneck_pallas.1} parent=0 // pred_fallthru
    _
  // Predicated region
  $region26: #{dilated_bottleneck_pallas.1} parent=0 // pred_check
    _
  $region27: #{dilated_bottleneck_pallas.1} parent=0 // pred_check_branch
    %31 = sbr.rel (0) target = $region29
  $region28: #{dilated_bottleneck_pallas.1} parent=0 // pred_region
    _
  $region29: #{dilated_bottleneck_pallas.1} parent=0 // pred_fallthru
    _
  // Predicated region
  $region30: #{dilated_bottleneck_pallas.1} parent=0 // pred_check
    _
  $region31: #{dilated_bottleneck_pallas.1} parent=0 // pred_check_branch
    %33 = sbr.rel (0) target = $region33
  $region32: #{dilated_bottleneck_pallas.1} parent=0 // pred_region
    _
  $region33: #{dilated_bottleneck_pallas.1} parent=0 // pred_fallthru
    _
  // Predicated region
  $region34: #{dilated_bottleneck_pallas.1} parent=0 // pred_check
    _
  $region35: #{dilated_bottleneck_pallas.1} parent=0 // pred_check_branch
    %35 = sbr.rel (0) target = $region37
  $region36: #{dilated_bottleneck_pallas.1} parent=0 // pred_region
    _
  $region37: #{dilated_bottleneck_pallas.1} parent=0 // pred_fallthru
    _
  // Predicated region
  $region38: #{dilated_bottleneck_pallas.1} parent=0 // pred_check
    _
  $region39: #{dilated_bottleneck_pallas.1} parent=0 // pred_check_branch
    %37 = sbr.rel (0) target = $region41
  $region40: #{dilated_bottleneck_pallas.1} parent=0 // pred_region
    _
  $region41: #{dilated_bottleneck_pallas.1} parent=0 // pred_fallthru
    _
  // Predicated region
  $region42: #{dilated_bottleneck_pallas.1} parent=0 // pred_check
    _
  $region43: #{dilated_bottleneck_pallas.1} parent=0 // pred_check_branch
    %39 = sbr.rel (0) target = $region45
  $region44: #{dilated_bottleneck_pallas.1} parent=0 // pred_region
    _
  $region45: #{dilated_bottleneck_pallas.1} parent=0 // pred_fallthru
    _
  %v41 = vld [vmem:[%s0] sm:$0xff]
  %v42 = vld [vmem:[%s0 + $0x8] sm:$0xff]
  %v43 = vld [vmem:[%s0 + $0x10] sm:$0xff]
  %v44 = vld [vmem:[%s0 + $0x18] sm:$0xff]
  %45 = vrot.lane.b32.xlu0 %v41, 34
  %v46 = vpop.permute.xlu0 %45
  %47 = vrot.lane.b32.xlu0 %v42, 34
  %v48 = vpop.permute.xlu0 %47
  %49 = vrot.lane.b32.xlu0 %v43, 34
  %v50 = vpop.permute.xlu0 %49
  %51 = vrot.lane.b32.xlu0 %v44, 34
  %v52 = vpop.permute.xlu0 %51
  %v53 = vlaneseq
  %v54 = vand.u32 %v53, 127
  %vm55 = vcmp.lt.s32.totalorder %v54, 34
  %v56 = vsel %vm55, %v50, %v52
  %v57 = vsel %vm55, %v48, %v50
  %v58 = vsel %vm55, %v46, %v48
  %v59 = vsel %vm55, %v52, %v46
  %v60 = vld [vmem:[%s1] ss:$8 sm:$0xf]
  %v62 = vlaneseq
  %v63 = vshrl.u32 %v62, 7
  %v64 = vsub.s32 0, %v63
  %v65 = vrot.slane %v60, %v64
  %v66 = vlaneseq
  %v67 = vshrl.u32 %v66, 7
  %v68 = vsub.s32 1, %v67
  %v69 = vrot.slane %v60, %v68
  %v70 = vlaneseq
  %v71 = vshrl.u32 %v70, 7
  %v72 = vsub.s32 2, %v71
  %v73 = vrot.slane %v60, %v72
  %v74 = vlaneseq
  %v75 = vshrl.u32 %v74, 7
  %v76 = vsub.s32 3, %v75
  %v77 = vrot.slane %v60, %v76
  %v82 = vmul.f32 %v59, %v65
  %v83 = vmul.f32 %v58, %v69
  %v84 = vmul.f32 %v57, %v73
  %v85 = vmul.f32 %v56, %v77
  %v86 = vpack.c.bf16 %v82, %v82
  %v87 = vpack.c.bf16 %v83, %v83
  %v88 = vpack.c.bf16 %v84, %v84
  %v89 = vpack.c.bf16 %v85, %v85
  %v94 = vunpack.c.l.b16 %v86
  %v95 = vunpack.c.l.b16 %v87
  %v96 = vunpack.c.l.b16 %v88
  %v97 = vunpack.c.l.b16 %v89
  %v98 = vpack.c.b16 %v95, %v94
  %v99 = vpack.c.b16 %v97, %v96
  %102 = vst [vmem:[#allocation2] sm:$0xff] %v98
  %103 = vst [vmem:[#allocation2 + $0x8] sm:$0xff] %v99
  %104 = vrot.lane.b32.xlu0 %v41, 32
  %v105 = vpop.permute.xlu0 %104
  %106 = vrot.lane.b32.xlu0 %v42, 32
  %v107 = vpop.permute.xlu0 %106
  %108 = vrot.lane.b32.xlu0 %v43, 32
  %v109 = vpop.permute.xlu0 %108
  %110 = vrot.lane.b32.xlu0 %v44, 32
  %v111 = vpop.permute.xlu0 %110
  %vm112 = vcmp.lt.s32.totalorder %v54, 32
  %v113 = vsel %vm112, %v109, %v111
  %v114 = vsel %vm112, %v107, %v109
  %v115 = vsel %vm112, %v105, %v107
  %v116 = vsel %vm112, %v111, %v105
  %s117 = scalar_lea.vmem %s1, 1
  %v118 = vld [vmem:[%s117] ss:$8 sm:$0xf]
  %v120 = vlaneseq
  %v121 = vshrl.u32 %v120, 7
  %v122 = vsub.s32 0, %v121
  %v123 = vrot.slane %v118, %v122
  %v124 = vlaneseq
  %v125 = vshrl.u32 %v124, 7
  %v126 = vsub.s32 1, %v125
  %v127 = vrot.slane %v118, %v126
  %v128 = vlaneseq
  %v129 = vshrl.u32 %v128, 7
  %v130 = vsub.s32 2, %v129
  %v131 = vrot.slane %v118, %v130
  %v132 = vlaneseq
  %v133 = vshrl.u32 %v132, 7
  %v134 = vsub.s32 3, %v133
  %v135 = vrot.slane %v118, %v134
  %v140 = vmul.f32 %v116, %v123
  %v141 = vmul.f32 %v115, %v127
  %v142 = vmul.f32 %v114, %v131
  %v143 = vmul.f32 %v113, %v135
  %v144 = vpack.c.bf16 %v140, %v140
  %v145 = vpack.c.bf16 %v141, %v141
  %v146 = vpack.c.bf16 %v142, %v142
  %v147 = vpack.c.bf16 %v143, %v143
  %v152 = vunpack.c.l.b16 %v144
  %v153 = vunpack.c.l.b16 %v145
  %v154 = vunpack.c.l.b16 %v146
  %v155 = vunpack.c.l.b16 %v147
  %v156 = vpack.c.b16 %v153, %v152
  %v157 = vpack.c.b16 %v155, %v154
  %160 = vst [vmem:[#allocation2 + $0x10] sm:$0xff] %v156
  %161 = vst [vmem:[#allocation2 + $0x18] sm:$0xff] %v157
  %162 = vrot.lane.b32.xlu0 %v41, 30
  %v163 = vpop.permute.xlu0 %162
  %164 = vrot.lane.b32.xlu0 %v42, 30
  %v165 = vpop.permute.xlu0 %164
  %166 = vrot.lane.b32.xlu0 %v43, 30
  %v167 = vpop.permute.xlu0 %166
  %168 = vrot.lane.b32.xlu0 %v44, 30
  %v169 = vpop.permute.xlu0 %168
  %vm170 = vcmp.lt.s32.totalorder %v54, 30
  %v171 = vsel %vm170, %v167, %v169
  %v172 = vsel %vm170, %v165, %v167
  %v173 = vsel %vm170, %v163, %v165
  %v174 = vsel %vm170, %v169, %v163
  %s175 = scalar_lea.vmem %s1, 2
  %v176 = vld [vmem:[%s175] ss:$8 sm:$0xf]
  %v178 = vlaneseq
  %v179 = vshrl.u32 %v178, 7
  %v180 = vsub.s32 0, %v179
  %v181 = vrot.slane %v176, %v180
  %v182 = vlaneseq
  %v183 = vshrl.u32 %v182, 7
  %v184 = vsub.s32 1, %v183
  %v185 = vrot.slane %v176, %v184
  %v186 = vlaneseq
  %v187 = vshrl.u32 %v186, 7
  %v188 = vsub.s32 2, %v187
  %v189 = vrot.slane %v176, %v188
  %v190 = vlaneseq
  %v191 = vshrl.u32 %v190, 7
  %v192 = vsub.s32 3, %v191
  %v193 = vrot.slane %v176, %v192
  %v198 = vmul.f32 %v174, %v181
  %v199 = vmul.f32 %v173, %v185
  %v200 = vmul.f32 %v172, %v189
  %v201 = vmul.f32 %v171, %v193
  %v202 = vpack.c.bf16 %v198, %v198
  %v203 = vpack.c.bf16 %v199, %v199
  %v204 = vpack.c.bf16 %v200, %v200
  %v205 = vpack.c.bf16 %v201, %v201
  %v210 = vunpack.c.l.b16 %v202
  %v211 = vunpack.c.l.b16 %v203
  %v212 = vunpack.c.l.b16 %v204
  %v213 = vunpack.c.l.b16 %v205
  %v214 = vpack.c.b16 %v211, %v210
  %v215 = vpack.c.b16 %v213, %v212
  %218 = vst [vmem:[#allocation2 + $0x20] sm:$0xff] %v214
  %219 = vst [vmem:[#allocation2 + $0x28] sm:$0xff] %v215
  %220 = vrot.lane.b32.xlu0 %v41, 2
  %v221 = vpop.permute.xlu0 %220
  %222 = vrot.lane.b32.xlu0 %v42, 2
  %v223 = vpop.permute.xlu0 %222
  %224 = vrot.lane.b32.xlu0 %v43, 2
  %v225 = vpop.permute.xlu0 %224
  %226 = vrot.lane.b32.xlu0 %v44, 2
  %v227 = vpop.permute.xlu0 %226
  %vm228 = vcmp.lt.s32.totalorder %v54, 2
  %v229 = vsel %vm228, %v225, %v227
  %v230 = vsel %vm228, %v223, %v225
  %v231 = vsel %vm228, %v221, %v223
  %v232 = vsel %vm228, %v227, %v221
  %s233 = scalar_lea.vmem %s1, 3
  %v234 = vld [vmem:[%s233] ss:$8 sm:$0xf]
  %v236 = vlaneseq
  %v237 = vshrl.u32 %v236, 7
  %v238 = vsub.s32 0, %v237
  %v239 = vrot.slane %v234, %v238
  %v240 = vlaneseq
  %v241 = vshrl.u32 %v240, 7
  %v242 = vsub.s32 1, %v241
  %v243 = vrot.slane %v234, %v242
  %v244 = vlaneseq
  %v245 = vshrl.u32 %v244, 7
  %v246 = vsub.s32 2, %v245
  %v247 = vrot.slane %v234, %v246
  %v248 = vlaneseq
  %v249 = vshrl.u32 %v248, 7
  %v250 = vsub.s32 3, %v249
  %v251 = vrot.slane %v234, %v250
  %v256 = vmul.f32 %v232, %v239
  %v257 = vmul.f32 %v231, %v243
  %v258 = vmul.f32 %v230, %v247
  %v259 = vmul.f32 %v229, %v251
  %v260 = vpack.c.bf16 %v256, %v256
  %v261 = vpack.c.bf16 %v257, %v257
  %v262 = vpack.c.bf16 %v258, %v258
  %v263 = vpack.c.bf16 %v259, %v259
  %v268 = vunpack.c.l.b16 %v260
  %v269 = vunpack.c.l.b16 %v261
  %v270 = vunpack.c.l.b16 %v262
  %v271 = vunpack.c.l.b16 %v263
  %v272 = vpack.c.b16 %v269, %v268
  %v273 = vpack.c.b16 %v271, %v270
  %276 = vst [vmem:[#allocation2 + $0x30] sm:$0xff] %v272
  %277 = vst [vmem:[#allocation2 + $0x38] sm:$0xff] %v273
  %v278 = vpack.c.bf16 %v41, %v41
  %v279 = vpack.c.bf16 %v42, %v42
  %v280 = vpack.c.bf16 %v43, %v43
  %v281 = vpack.c.bf16 %v44, %v44
  %v286 = vunpack.c.l.b16 %v278
  %v287 = vunpack.c.l.b16 %v279
  %v288 = vunpack.c.l.b16 %v280
  %v289 = vunpack.c.l.b16 %v281
  %v290 = vpack.c.b16 %v287, %v286
  %v291 = vpack.c.b16 %v289, %v288
  %294 = vst [vmem:[#allocation2 + $0x40] sm:$0xff] %v290
  %295 = vst [vmem:[#allocation2 + $0x48] sm:$0xff] %v291
  %296 = vrot.lane.b32.xlu0 %v41, 126
  %v297 = vpop.permute.xlu0 %296
  %298 = vrot.lane.b32.xlu0 %v42, 126
  %v299 = vpop.permute.xlu0 %298
  %300 = vrot.lane.b32.xlu0 %v43, 126
  %v301 = vpop.permute.xlu0 %300
  %302 = vrot.lane.b32.xlu0 %v44, 126
  %v303 = vpop.permute.xlu0 %302
  %vm304 = vcmp.lt.s32.totalorder %v54, 126
  %v305 = vsel %vm304, %v301, %v303
  %v306 = vsel %vm304, %v299, %v301
  %v307 = vsel %vm304, %v297, %v299
  %v308 = vsel %vm304, %v303, %v297
  %s309 = scalar_lea.vmem %s1, 5
  %v310 = vld [vmem:[%s309] ss:$8 sm:$0xf]
  %v312 = vlaneseq
  %v313 = vshrl.u32 %v312, 7
  %v314 = vsub.s32 0, %v313
  %v315 = vrot.slane %v310, %v314
  %v316 = vlaneseq
  %v317 = vshrl.u32 %v316, 7
  %v318 = vsub.s32 1, %v317
  %v319 = vrot.slane %v310, %v318
  %v320 = vlaneseq
  %v321 = vshrl.u32 %v320, 7
  %v322 = vsub.s32 2, %v321
  %v323 = vrot.slane %v310, %v322
  %v324 = vlaneseq
  %v325 = vshrl.u32 %v324, 7
  %v326 = vsub.s32 3, %v325
  %v327 = vrot.slane %v310, %v326
  %v332 = vmul.f32 %v307, %v315
  %v333 = vmul.f32 %v306, %v319
  %v334 = vmul.f32 %v305, %v323
  %v335 = vmul.f32 %v308, %v327
  %v336 = vpack.c.bf16 %v332, %v332
  %v337 = vpack.c.bf16 %v333, %v333
  %v338 = vpack.c.bf16 %v334, %v334
  %v339 = vpack.c.bf16 %v335, %v335
  %v344 = vunpack.c.l.b16 %v336
  %v345 = vunpack.c.l.b16 %v337
  %v346 = vunpack.c.l.b16 %v338
  %v347 = vunpack.c.l.b16 %v339
  %v348 = vpack.c.b16 %v345, %v344
  %v349 = vpack.c.b16 %v347, %v346
  %352 = vst [vmem:[#allocation2 + $0x50] sm:$0xff] %v348
  %353 = vst [vmem:[#allocation2 + $0x58] sm:$0xff] %v349
  %354 = vrot.lane.b32.xlu0 %v41, 98
  %v355 = vpop.permute.xlu0 %354
  %356 = vrot.lane.b32.xlu0 %v42, 98
  %v357 = vpop.permute.xlu0 %356
  %358 = vrot.lane.b32.xlu0 %v43, 98
  %v359 = vpop.permute.xlu0 %358
  %360 = vrot.lane.b32.xlu0 %v44, 98
  %v361 = vpop.permute.xlu0 %360
  %vm362 = vcmp.lt.s32.totalorder %v54, 98
  %v363 = vsel %vm362, %v359, %v361
  %v364 = vsel %vm362, %v357, %v359
  %v365 = vsel %vm362, %v355, %v357
  %v366 = vsel %vm362, %v361, %v355
  %s367 = scalar_lea.vmem %s1, 6
  %v368 = vld [vmem:[%s367] ss:$8 sm:$0xf]
  %v370 = vlaneseq
  %v371 = vshrl.u32 %v370, 7
  %v372 = vsub.s32 0, %v371
  %v373 = vrot.slane %v368, %v372
  %v374 = vlaneseq
  %v375 = vshrl.u32 %v374, 7
  %v376 = vsub.s32 1, %v375
  %v377 = vrot.slane %v368, %v376
  %v378 = vlaneseq
  %v379 = vshrl.u32 %v378, 7
  %v380 = vsub.s32 2, %v379
  %v381 = vrot.slane %v368, %v380
  %v382 = vlaneseq
  %v383 = vshrl.u32 %v382, 7
  %v384 = vsub.s32 3, %v383
  %v385 = vrot.slane %v368, %v384
  %v390 = vmul.f32 %v365, %v373
  %v391 = vmul.f32 %v364, %v377
  %v392 = vmul.f32 %v363, %v381
  %v393 = vmul.f32 %v366, %v385
  %v394 = vpack.c.bf16 %v390, %v390
  %v395 = vpack.c.bf16 %v391, %v391
  %v396 = vpack.c.bf16 %v392, %v392
  %v397 = vpack.c.bf16 %v393, %v393
  %v402 = vunpack.c.l.b16 %v394
  %v403 = vunpack.c.l.b16 %v395
  %v404 = vunpack.c.l.b16 %v396
  %v405 = vunpack.c.l.b16 %v397
  %v406 = vpack.c.b16 %v403, %v402
  %v407 = vpack.c.b16 %v405, %v404
  %410 = vst [vmem:[#allocation2 + $0x60] sm:$0xff] %v406
  %411 = vst [vmem:[#allocation2 + $0x68] sm:$0xff] %v407
  %412 = vrot.lane.b32.xlu0 %v41, 96
  %v413 = vpop.permute.xlu0 %412
  %414 = vrot.lane.b32.xlu0 %v42, 96
  %v415 = vpop.permute.xlu0 %414
  %416 = vrot.lane.b32.xlu0 %v43, 96
  %v417 = vpop.permute.xlu0 %416
  %418 = vrot.lane.b32.xlu0 %v44, 96
  %v419 = vpop.permute.xlu0 %418
  %vm420 = vcmp.lt.s32.totalorder %v54, 96
  %v421 = vsel %vm420, %v417, %v419
  %v422 = vsel %vm420, %v415, %v417
  %v423 = vsel %vm420, %v413, %v415
  %v424 = vsel %vm420, %v419, %v413
  %s425 = scalar_lea.vmem %s1, 7
  %v426 = vld [vmem:[%s425] ss:$8 sm:$0xf]
  %v428 = vlaneseq
  %v429 = vshrl.u32 %v428, 7
  %v430 = vsub.s32 0, %v429
  %v431 = vrot.slane %v426, %v430
  %v432 = vlaneseq
  %v433 = vshrl.u32 %v432, 7
  %v434 = vsub.s32 1, %v433
  %v435 = vrot.slane %v426, %v434
  %v436 = vlaneseq
  %v437 = vshrl.u32 %v436, 7
  %v438 = vsub.s32 2, %v437
  %v439 = vrot.slane %v426, %v438
  %v440 = vlaneseq
  %v441 = vshrl.u32 %v440, 7
  %v442 = vsub.s32 3, %v441
  %v443 = vrot.slane %v426, %v442
  %v448 = vmul.f32 %v423, %v431
  %v449 = vmul.f32 %v422, %v435
  %v450 = vmul.f32 %v421, %v439
  %v451 = vmul.f32 %v424, %v443
  %v452 = vpack.c.bf16 %v448, %v448
  %v453 = vpack.c.bf16 %v449, %v449
  %v454 = vpack.c.bf16 %v450, %v450
  %v455 = vpack.c.bf16 %v451, %v451
  %v460 = vunpack.c.l.b16 %v452
  %v461 = vunpack.c.l.b16 %v453
  %v462 = vunpack.c.l.b16 %v454
  %v463 = vunpack.c.l.b16 %v455
  %v464 = vpack.c.b16 %v461, %v460
  %v465 = vpack.c.b16 %v463, %v462
  %468 = vst [vmem:[#allocation2 + $0x70] sm:$0xff] %v464
  %469 = vst [vmem:[#allocation2 + $0x78] sm:$0xff] %v465
  %470 = vrot.lane.b32.xlu0 %v41, 94
  %v471 = vpop.permute.xlu0 %470
  %472 = vrot.lane.b32.xlu0 %v42, 94
  %v473 = vpop.permute.xlu0 %472
  %474 = vrot.lane.b32.xlu0 %v43, 94
  %v475 = vpop.permute.xlu0 %474
  %476 = vrot.lane.b32.xlu0 %v44, 94
  %v477 = vpop.permute.xlu0 %476
  %vm478 = vcmp.lt.s32.totalorder %v54, 94
  %v479 = vsel %vm478, %v475, %v477
  %v480 = vsel %vm478, %v473, %v475
  %v481 = vsel %vm478, %v471, %v473
  %v482 = vsel %vm478, %v477, %v471
  %s483 = scalar_lea.vmem %s1, 32
  %v484 = vld [vmem:[%s483] ss:$8 sm:$0xf]
  %v486 = vlaneseq
  %v487 = vshrl.u32 %v486, 7
  %v488 = vsub.s32 0, %v487
  %v489 = vrot.slane %v484, %v488
  %v490 = vlaneseq
  %v491 = vshrl.u32 %v490, 7
  %v492 = vsub.s32 1, %v491
  %v493 = vrot.slane %v484, %v492
  %v494 = vlaneseq
  %v495 = vshrl.u32 %v494, 7
  %v496 = vsub.s32 2, %v495
  %v497 = vrot.slane %v484, %v496
  %v498 = vlaneseq
  %v499 = vshrl.u32 %v498, 7
  %v500 = vsub.s32 3, %v499
  %v501 = vrot.slane %v484, %v500
  %v506 = vmul.f32 %v481, %v489
  %v507 = vmul.f32 %v480, %v493
  %v508 = vmul.f32 %v479, %v497
  %v509 = vmul.f32 %v482, %v501
  %v510 = vpack.c.bf16 %v506, %v506
  %v511 = vpack.c.bf16 %v507, %v507
  %v512 = vpack.c.bf16 %v508, %v508
  %v513 = vpack.c.bf16 %v509, %v509
  %v518 = vunpack.c.l.b16 %v510
  %v519 = vunpack.c.l.b16 %v511
  %v520 = vunpack.c.l.b16 %v512
  %v521 = vunpack.c.l.b16 %v513
  %v522 = vpack.c.b16 %v519, %v518
  %v523 = vpack.c.b16 %v521, %v520
  %526 = vst [vmem:[#allocation2 + $0x80] sm:$0xff] %v522
  %527 = vst [vmem:[#allocation2 + $0x88] sm:$0xff] %v523
  %v528 = vld [vmem:[%s3] sm:$0xf]
  %v529 = vld [vmem:[%s3 + $0x4] sm:$0xf]
  %v530 = vld [vmem:[#allocation2] sm:$0xff]
  %v531 = vld [vmem:[#allocation2 + $0x8] sm:$0xff]
  %v532 = vld [vmem:[#allocation2 + $0x10] sm:$0xff]
  %v533 = vld [vmem:[#allocation2 + $0x18] sm:$0xff]
  %v534 = vld [vmem:[#allocation2 + $0x20] sm:$0xff]
  %v535 = vld [vmem:[#allocation2 + $0x28] sm:$0xff]
  %v536 = vld [vmem:[#allocation2 + $0x30] sm:$0xff]
  %v537 = vld [vmem:[#allocation2 + $0x38] sm:$0xff]
  %v538 = vld [vmem:[#allocation2 + $0x40] sm:$0xff]
  %v539 = vld [vmem:[#allocation2 + $0x48] sm:$0xff]
  %v540 = vld [vmem:[#allocation2 + $0x50] sm:$0xff]
  %v541 = vld [vmem:[#allocation2 + $0x58] sm:$0xff]
  %v542 = vld [vmem:[#allocation2 + $0x60] sm:$0xff]
  %v543 = vld [vmem:[#allocation2 + $0x68] sm:$0xff]
  %v544 = vld [vmem:[#allocation2 + $0x70] sm:$0xff]
  %v545 = vld [vmem:[#allocation2 + $0x78] sm:$0xff]
  %v546 = vld [vmem:[#allocation2 + $0x80] sm:$0xff]
  %v547 = vld [vmem:[#allocation2 + $0x88] sm:$0xff]
  %v548 = vld [vmem:[%s4] sm:$0xff]
  %v549 = vld [vmem:[%s4 + $0x8] sm:$0xff]
  %551 = vset.pattern.permute.xlu0 0
  %552 = vperm.xlu0 %551, %v548
  %v553 = vpop.permute.xlu0 %552
  %556 = vset.pattern.permute.xlu0 0
  %557 = vperm.xlu0 %556, %v549
  %v558 = vpop.permute.xlu0 %557
  %v562 = vunpack.c.l.b16 %v528
  %v563 = vunpack.c.l.b16 %v529
  %v564 = vpack.c.b16 %v563, %v562
  %v583 = vunpack.c.l.b16 %v530
  %v584 = vunpack.c.h.b16 %v530
  %v585 = vunpack.c.l.b16 %v531
  %v586 = vunpack.c.h.b16 %v531
  %v587 = vunpack.c.l.b16 %v532
  %v588 = vunpack.c.h.b16 %v532
  %v589 = vunpack.c.l.b16 %v533
  %v590 = vunpack.c.h.b16 %v533
  %v591 = vunpack.c.l.b16 %v534
  %v592 = vunpack.c.h.b16 %v534
  %v593 = vunpack.c.l.b16 %v535
  %v594 = vunpack.c.h.b16 %v535
  %v595 = vunpack.c.l.b16 %v536
  %v596 = vunpack.c.h.b16 %v536
  %v597 = vunpack.c.l.b16 %v537
  %v598 = vunpack.c.h.b16 %v537
  %v599 = vunpack.c.l.b16 %v538
  %v600 = vunpack.c.h.b16 %v538
  %v601 = vunpack.c.l.b16 %v539
  %v602 = vunpack.c.h.b16 %v539
  %v603 = vunpack.c.l.b16 %v540
  %v604 = vunpack.c.h.b16 %v540
  %v605 = vunpack.c.l.b16 %v541
  %v606 = vunpack.c.h.b16 %v541
  %v607 = vunpack.c.l.b16 %v542
  %v608 = vunpack.c.h.b16 %v542
  %v609 = vunpack.c.l.b16 %v543
  %v610 = vunpack.c.h.b16 %v543
  %v611 = vunpack.c.l.b16 %v544
  %v612 = vunpack.c.h.b16 %v544
  %v613 = vunpack.c.l.b16 %v545
  %v614 = vunpack.c.h.b16 %v545
  %v615 = vunpack.c.l.b16 %v546
  %v616 = vunpack.c.h.b16 %v546
  %v617 = vunpack.c.l.b16 %v547
  %v618 = vunpack.c.h.b16 %v547
  %v619 = vpack.c.b16 %v587, %v583
  %v620 = vpack.c.b16 %v588, %v584
  %v621 = vpack.c.b16 %v589, %v585
  %v622 = vpack.c.b16 %v590, %v586
  %v623 = vpack.c.b16 %v595, %v591
  %v624 = vpack.c.b16 %v596, %v592
  %v625 = vpack.c.b16 %v597, %v593
  %v626 = vpack.c.b16 %v598, %v594
  %v627 = vpack.c.b16 %v603, %v599
  %v628 = vpack.c.b16 %v604, %v600
  %v629 = vpack.c.b16 %v605, %v601
  %v630 = vpack.c.b16 %v606, %v602
  %v631 = vpack.c.b16 %v611, %v607
  %v632 = vpack.c.b16 %v612, %v608
  %v633 = vpack.c.b16 %v613, %v609
  %v634 = vpack.c.b16 %v614, %v610
  %v635 = vpack.c.b16 %v615, %v615
  %v636 = vpack.c.b16 %v616, %v616
  %v637 = vpack.c.b16 %v617, %v617
  %v638 = vpack.c.b16 %v618, %v618
  %vm655 = vcmask 588800
  %v657 = vsel %vm655, %v564, 0
  %vm659 = vcmask 1043456
  %v661 = vsel %vm659, %v635, 0
  %v664 = vsel %vm659, %v636, 0
  %v667 = vsel %vm659, %v637, 0
  %v670 = vsel %vm659, %v638, 0
  %672 = vmatprep.subr.bf16.mxu0 0
  %673 = vmatpush1.bf16.msra.mxu0 0
  %674 = vmatprep.subr.bf16.mxu0 0
  %675 = vmatpush1.bf16.msra.mxu0 0
  %676 = vmatprep.subr.bf16.mxu0 0
  %677 = vmatpush1.bf16.msra.mxu0 0
  %678 = vmatprep.subr.bf16.mxu0 %v664
  %679 = vmatpush1.bf16.msra.mxu0 %v661
  %680 = vmatprep.subr.bf16.mxu0 %v632
  %681 = vmatpush1.bf16.msra.mxu0 %v631
  %682 = vmatprep.subr.bf16.mxu0 %v628
  %683 = vmatpush1.bf16.msra.mxu0 %v627
  %684 = vmatprep.subr.bf16.mxu0 %v624
  %685 = vmatpush1.bf16.msra.mxu0 %v623
  %686 = vmatprep.subr.bf16.mxu0 %v620
  %687 = vmatpush1.bf16.msra.mxu0 %v619
  %688 = vmatprep.subr.bf16.mxu0 0
  %689 = vmatpush2.bf16.msra.mxu0 0
  %690 = vmatprep.subr.bf16.mxu0 0
  %691 = vmatpush2.bf16.msra.mxu0 0
  %692 = vmatprep.subr.bf16.mxu0 0
  %693 = vmatpush2.bf16.msra.mxu0 0
  %694 = vmatprep.subr.bf16.mxu0 0
  %695 = vmatpush2.bf16.msra.mxu0 0
  %696 = vmatprep.subr.bf16.mxu0 0
  %697 = vmatpush2.bf16.msra.mxu0 0
  %698 = vmatprep.subr.bf16.mxu0 0
  %699 = vmatpush2.bf16.msra.mxu0 0
  %700 = vmatprep.subr.bf16.mxu0 0
  %701 = vmatpush2.bf16.msra.mxu0 0
  %702 = vmatprep.subr.bf16.mxu0 0
  %703 = vmatpush2.bf16.msra.mxu0 0
  %704 = vmatprep.mubr.bf16.mxu0 0
  %705 = vmatmul.mubr.bf16.gmra.mxu0 %v657
  %v706 = vpop.f32.mrf.mxu0
  %v707 = vadd.f32 %v553, %v706
  %v708 = vpop.f32.mrf.mxu0
  %v709 = vadd.f32 %v553, %v708
  %v710 = vpop.f32.mrf.mxu0
  %v711 = vadd.f32 %v558, %v710
  %v712 = vpop.f32.mrf.mxu0
  %v713 = vadd.f32 %v558, %v712
  %714 = vdwg.mxu0
  %715 = vmatprep.subr.bf16.mxu0 0
  %716 = vmatpush1.bf16.msra.mxu0 0
  %717 = vmatprep.subr.bf16.mxu0 0
  %718 = vmatpush1.bf16.msra.mxu0 0
  %719 = vmatprep.subr.bf16.mxu0 0
  %720 = vmatpush1.bf16.msra.mxu0 0
  %721 = vmatprep.subr.bf16.mxu0 %v670
  %722 = vmatpush1.bf16.msra.mxu0 %v667
  %723 = vmatprep.subr.bf16.mxu0 %v634
  %724 = vmatpush1.bf16.msra.mxu0 %v633
  %725 = vmatprep.subr.bf16.mxu0 %v630
  %726 = vmatpush1.bf16.msra.mxu0 %v629
  %727 = vmatprep.subr.bf16.mxu0 %v626
  %728 = vmatpush1.bf16.msra.mxu0 %v625
  %729 = vmatprep.subr.bf16.mxu0 %v622
  %730 = vmatpush1.bf16.msra.mxu0 %v621
  %731 = vmatprep.subr.bf16.mxu0 0
  %732 = vmatpush2.bf16.msra.mxu0 0
  %733 = vmatprep.subr.bf16.mxu0 0
  %734 = vmatpush2.bf16.msra.mxu0 0
  %735 = vmatprep.subr.bf16.mxu0 0
  %736 = vmatpush2.bf16.msra.mxu0 0
  %737 = vmatprep.subr.bf16.mxu0 0
  %738 = vmatpush2.bf16.msra.mxu0 0
  %739 = vmatprep.subr.bf16.mxu0 0
  %740 = vmatpush2.bf16.msra.mxu0 0
  %741 = vmatprep.subr.bf16.mxu0 0
  %742 = vmatpush2.bf16.msra.mxu0 0
  %743 = vmatprep.subr.bf16.mxu0 0
  %744 = vmatpush2.bf16.msra.mxu0 0
  %745 = vmatprep.subr.bf16.mxu0 0
  %746 = vmatpush2.bf16.msra.mxu0 0
  %747 = vmatprep.mubr.bf16.mxu0 0
  %748 = vmatmul.mubr.bf16.gmra.mxu0 %v657
  %v749 = vpop.f32.mrf.mxu0
  %v750 = vadd.f32 %v553, %v749
  %v751 = vpop.f32.mrf.mxu0
  %v752 = vadd.f32 %v553, %v751
  %v753 = vpop.f32.mrf.mxu0
  %v754 = vadd.f32 %v558, %v753
  %v755 = vpop.f32.mrf.mxu0
  %v756 = vadd.f32 %v558, %v755
  %757 = vdwg.mxu0
  %v758 = vmax.f32 %v707, 0.0
  %v759 = vmax.f32 %v709, 0.0
  %v760 = vmax.f32 %v750, 0.0
  %v761 = vmax.f32 %v752, 0.0
  %v762 = vmax.f32 %v711, 0.0
  %v763 = vmax.f32 %v713, 0.0
  %v764 = vmax.f32 %v754, 0.0
  %v765 = vmax.f32 %v756, 0.0
  %766 = vrot.lane.b32.xlu0 %v758, 68
  %v767 = vpop.permute.xlu0 %766
  %768 = vrot.lane.b32.xlu0 %v762, 68
  %v769 = vpop.permute.xlu0 %768
  %770 = vrot.lane.b32.xlu0 %v759, 68
  %v771 = vpop.permute.xlu0 %770
  %772 = vrot.lane.b32.xlu0 %v763, 68
  %v773 = vpop.permute.xlu0 %772
  %774 = vrot.lane.b32.xlu0 %v760, 68
  %v775 = vpop.permute.xlu0 %774
  %776 = vrot.lane.b32.xlu0 %v764, 68
  %v777 = vpop.permute.xlu0 %776
  %778 = vrot.lane.b32.xlu0 %v761, 68
  %v779 = vpop.permute.xlu0 %778
  %780 = vrot.lane.b32.xlu0 %v765, 68
  %v781 = vpop.permute.xlu0 %780
  %vm782 = vcmp.lt.s32.totalorder %v54, 68
  %v783 = vsel %vm782, %v775, %v779
  %v784 = vsel %vm782, %v777, %v781
  %v785 = vsel %vm782, %v771, %v775
  %v786 = vsel %vm782, %v773, %v777
  %v787 = vsel %vm782, %v767, %v771
  %v788 = vsel %vm782, %v769, %v773
  %v789 = vsel %vm782, %v779, %v767
  %v790 = vsel %vm782, %v781, %v769
  %v791 = vld [vmem:[%s2] ss:$8 sm:$0xf]
  %v793 = vlaneseq
  %v794 = vshrl.u32 %v793, 7
  %v795 = vsub.s32 0, %v794
  %v796 = vrot.slane %v791, %v795
  %v797 = vlaneseq
  %v798 = vshrl.u32 %v797, 7
  %v799 = vsub.s32 1, %v798
  %v800 = vrot.slane %v791, %v799
  %v801 = vlaneseq
  %v802 = vshrl.u32 %v801, 7
  %v803 = vsub.s32 2, %v802
  %v804 = vrot.slane %v791, %v803
  %v805 = vlaneseq
  %v806 = vshrl.u32 %v805, 7
  %v807 = vsub.s32 3, %v806
  %v808 = vrot.slane %v791, %v807
  %v813 = vmul.f32 %v789, %v796
  %v814 = vmul.f32 %v787, %v800
  %v815 = vmul.f32 %v785, %v804
  %v816 = vmul.f32 %v783, %v808
  %v817 = vmul.f32 %v790, %v796
  %v818 = vmul.f32 %v788, %v800
  %v819 = vmul.f32 %v786, %v804
  %v820 = vmul.f32 %v784, %v808
  %v821 = vpack.c.bf16 %v817, %v813
  %v822 = vpack.c.bf16 %v818, %v814
  %v823 = vpack.c.bf16 %v819, %v815
  %v824 = vpack.c.bf16 %v820, %v816
  %v829 = vunpack.c.l.b16 %v821
  %v830 = vunpack.c.l.b16 %v822
  %v831 = vunpack.c.l.b16 %v823
  %v832 = vunpack.c.l.b16 %v824
  %v833 = vunpack.c.h.b16 %v821
  %v834 = vunpack.c.h.b16 %v822
  %v835 = vunpack.c.h.b16 %v823
  %v836 = vunpack.c.h.b16 %v824
  %v837 = vpack.c.b16 %v830, %v829
  %v838 = vpack.c.b16 %v832, %v831
  %v839 = vpack.c.b16 %v834, %v833
  %v840 = vpack.c.b16 %v836, %v835
  %845 = vst [vmem:[#allocation3] sm:$0xff] %v837
  %846 = vst [vmem:[#allocation3 + $0x8] sm:$0xff] %v838
  %847 = vst [vmem:[#allocation3 + $0x10] sm:$0xff] %v839
  %848 = vst [vmem:[#allocation3 + $0x18] sm:$0xff] %v840
  %849 = vrot.lane.b32.xlu0 %v758, 64
  %v850 = vpop.permute.xlu0 %849
  %851 = vrot.lane.b32.xlu0 %v762, 64
  %v852 = vpop.permute.xlu0 %851
  %853 = vrot.lane.b32.xlu0 %v759, 64
  %v854 = vpop.permute.xlu0 %853
  %855 = vrot.lane.b32.xlu0 %v763, 64
  %v856 = vpop.permute.xlu0 %855
  %857 = vrot.lane.b32.xlu0 %v760, 64
  %v858 = vpop.permute.xlu0 %857
  %859 = vrot.lane.b32.xlu0 %v764, 64
  %v860 = vpop.permute.xlu0 %859
  %861 = vrot.lane.b32.xlu0 %v761, 64
  %v862 = vpop.permute.xlu0 %861
  %863 = vrot.lane.b32.xlu0 %v765, 64
  %v864 = vpop.permute.xlu0 %863
  %vm865 = vcmp.lt.s32.totalorder %v54, 64
  %v866 = vsel %vm865, %v858, %v862
  %v867 = vsel %vm865, %v860, %v864
  %v868 = vsel %vm865, %v854, %v858
  %v869 = vsel %vm865, %v856, %v860
  %v870 = vsel %vm865, %v850, %v854
  %v871 = vsel %vm865, %v852, %v856
  %v872 = vsel %vm865, %v862, %v850
  %v873 = vsel %vm865, %v864, %v852
  %s874 = scalar_lea.vmem %s2, 1
  %v875 = vld [vmem:[%s874] ss:$8 sm:$0xf]
  %v877 = vlaneseq
  %v878 = vshrl.u32 %v877, 7
  %v879 = vsub.s32 0, %v878
  %v880 = vrot.slane %v875, %v879
  %v881 = vlaneseq
  %v882 = vshrl.u32 %v881, 7
  %v883 = vsub.s32 1, %v882
  %v884 = vrot.slane %v875, %v883
  %v885 = vlaneseq
  %v886 = vshrl.u32 %v885, 7
  %v887 = vsub.s32 2, %v886
  %v888 = vrot.slane %v875, %v887
  %v889 = vlaneseq
  %v890 = vshrl.u32 %v889, 7
  %v891 = vsub.s32 3, %v890
  %v892 = vrot.slane %v875, %v891
  %v897 = vmul.f32 %v872, %v880
  %v898 = vmul.f32 %v870, %v884
  %v899 = vmul.f32 %v868, %v888
  %v900 = vmul.f32 %v866, %v892
  %v901 = vmul.f32 %v873, %v880
  %v902 = vmul.f32 %v871, %v884
  %v903 = vmul.f32 %v869, %v888
  %v904 = vmul.f32 %v867, %v892
  %v905 = vpack.c.bf16 %v901, %v897
  %v906 = vpack.c.bf16 %v902, %v898
  %v907 = vpack.c.bf16 %v903, %v899
  %v908 = vpack.c.bf16 %v904, %v900
  %v913 = vunpack.c.l.b16 %v905
  %v914 = vunpack.c.l.b16 %v906
  %v915 = vunpack.c.l.b16 %v907
  %v916 = vunpack.c.l.b16 %v908
  %v917 = vunpack.c.h.b16 %v905
  %v918 = vunpack.c.h.b16 %v906
  %v919 = vunpack.c.h.b16 %v907
  %v920 = vunpack.c.h.b16 %v908
  %v921 = vpack.c.b16 %v914, %v913
  %v922 = vpack.c.b16 %v916, %v915
  %v923 = vpack.c.b16 %v918, %v917
  %v924 = vpack.c.b16 %v920, %v919
  %929 = vst [vmem:[#allocation3 + $0x20] sm:$0xff] %v921
  %930 = vst [vmem:[#allocation3 + $0x28] sm:$0xff] %v922
  %931 = vst [vmem:[#allocation3 + $0x30] sm:$0xff] %v923
  %932 = vst [vmem:[#allocation3 + $0x38] sm:$0xff] %v924
  %933 = vrot.lane.b32.xlu0 %v758, 60
  %v934 = vpop.permute.xlu0 %933
  %935 = vrot.lane.b32.xlu0 %v762, 60
  %v936 = vpop.permute.xlu0 %935
  %937 = vrot.lane.b32.xlu0 %v759, 60
  %v938 = vpop.permute.xlu0 %937
  %939 = vrot.lane.b32.xlu0 %v763, 60
  %v940 = vpop.permute.xlu0 %939
  %941 = vrot.lane.b32.xlu0 %v760, 60
  %v942 = vpop.permute.xlu0 %941
  %943 = vrot.lane.b32.xlu0 %v764, 60
  %v944 = vpop.permute.xlu0 %943
  %945 = vrot.lane.b32.xlu0 %v761, 60
  %v946 = vpop.permute.xlu0 %945
  %947 = vrot.lane.b32.xlu0 %v765, 60
  %v948 = vpop.permute.xlu0 %947
  %vm949 = vcmp.lt.s32.totalorder %v54, 60
  %v950 = vsel %vm949, %v942, %v946
  %v951 = vsel %vm949, %v944, %v948
  %v952 = vsel %vm949, %v938, %v942
  %v953 = vsel %vm949, %v940, %v944
  %v954 = vsel %vm949, %v934, %v938
  %v955 = vsel %vm949, %v936, %v940
  %v956 = vsel %vm949, %v946, %v934
  %v957 = vsel %vm949, %v948, %v936
  %s958 = scalar_lea.vmem %s2, 2
  %v959 = vld [vmem:[%s958] ss:$8 sm:$0xf]
  %v961 = vlaneseq
  %v962 = vshrl.u32 %v961, 7
  %v963 = vsub.s32 0, %v962
  %v964 = vrot.slane %v959, %v963
  %v965 = vlaneseq
  %v966 = vshrl.u32 %v965, 7
  %v967 = vsub.s32 1, %v966
  %v968 = vrot.slane %v959, %v967
  %v969 = vlaneseq
  %v970 = vshrl.u32 %v969, 7
  %v971 = vsub.s32 2, %v970
  %v972 = vrot.slane %v959, %v971
  %v973 = vlaneseq
  %v974 = vshrl.u32 %v973, 7
  %v975 = vsub.s32 3, %v974
  %v976 = vrot.slane %v959, %v975
  %v981 = vmul.f32 %v956, %v964
  %v982 = vmul.f32 %v954, %v968
  %v983 = vmul.f32 %v952, %v972
  %v984 = vmul.f32 %v950, %v976
  %v985 = vmul.f32 %v957, %v964
  %v986 = vmul.f32 %v955, %v968
  %v987 = vmul.f32 %v953, %v972
  %v988 = vmul.f32 %v951, %v976
  %v989 = vpack.c.bf16 %v985, %v981
  %v990 = vpack.c.bf16 %v986, %v982
  %v991 = vpack.c.bf16 %v987, %v983
  %v992 = vpack.c.bf16 %v988, %v984
  %v997 = vunpack.c.l.b16 %v989
  %v998 = vunpack.c.l.b16 %v990
  %v999 = vunpack.c.l.b16 %v991
  %v1000 = vunpack.c.l.b16 %v992
  %v1001 = vunpack.c.h.b16 %v989
  %v1002 = vunpack.c.h.b16 %v990
  %v1003 = vunpack.c.h.b16 %v991
  %v1004 = vunpack.c.h.b16 %v992
  %v1005 = vpack.c.b16 %v998, %v997
  %v1006 = vpack.c.b16 %v1000, %v999
  %v1007 = vpack.c.b16 %v1002, %v1001
  %v1008 = vpack.c.b16 %v1004, %v1003
  %1013 = vst [vmem:[#allocation3 + $0x40] sm:$0xff] %v1005
  %1014 = vst [vmem:[#allocation3 + $0x48] sm:$0xff] %v1006
  %1015 = vst [vmem:[#allocation3 + $0x50] sm:$0xff] %v1007
  %1016 = vst [vmem:[#allocation3 + $0x58] sm:$0xff] %v1008
  %1017 = vrot.lane.b32.xlu0 %v758, 4
  %v1018 = vpop.permute.xlu0 %1017
  %1019 = vrot.lane.b32.xlu0 %v762, 4
  %v1020 = vpop.permute.xlu0 %1019
  %1021 = vrot.lane.b32.xlu0 %v759, 4
  %v1022 = vpop.permute.xlu0 %1021
  %1023 = vrot.lane.b32.xlu0 %v763, 4
  %v1024 = vpop.permute.xlu0 %1023
  %1025 = vrot.lane.b32.xlu0 %v760, 4
  %v1026 = vpop.permute.xlu0 %1025
  %1027 = vrot.lane.b32.xlu0 %v764, 4
  %v1028 = vpop.permute.xlu0 %1027
  %1029 = vrot.lane.b32.xlu0 %v761, 4
  %v1030 = vpop.permute.xlu0 %1029
  %1031 = vrot.lane.b32.xlu0 %v765, 4
  %v1032 = vpop.permute.xlu0 %1031
  %vm1033 = vcmp.lt.s32.totalorder %v54, 4
  %v1034 = vsel %vm1033, %v1026, %v1030
  %v1035 = vsel %vm1033, %v1028, %v1032
  %v1036 = vsel %vm1033, %v1022, %v1026
  %v1037 = vsel %vm1033, %v1024, %v1028
  %v1038 = vsel %vm1033, %v1018, %v1022
  %v1039 = vsel %vm1033, %v1020, %v1024
  %v1040 = vsel %vm1033, %v1030, %v1018
  %v1041 = vsel %vm1033, %v1032, %v1020
  %s1042 = scalar_lea.vmem %s2, 3
  %v1043 = vld [vmem:[%s1042] ss:$8 sm:$0xf]
  %v1045 = vlaneseq
  %v1046 = vshrl.u32 %v1045, 7
  %v1047 = vsub.s32 0, %v1046
  %v1048 = vrot.slane %v1043, %v1047
  %v1049 = vlaneseq
  %v1050 = vshrl.u32 %v1049, 7
  %v1051 = vsub.s32 1, %v1050
  %v1052 = vrot.slane %v1043, %v1051
  %v1053 = vlaneseq
  %v1054 = vshrl.u32 %v1053, 7
  %v1055 = vsub.s32 2, %v1054
  %v1056 = vrot.slane %v1043, %v1055
  %v1057 = vlaneseq
  %v1058 = vshrl.u32 %v1057, 7
  %v1059 = vsub.s32 3, %v1058
  %v1060 = vrot.slane %v1043, %v1059
  %v1065 = vmul.f32 %v1040, %v1048
  %v1066 = vmul.f32 %v1038, %v1052
  %v1067 = vmul.f32 %v1036, %v1056
  %v1068 = vmul.f32 %v1034, %v1060
  %v1069 = vmul.f32 %v1041, %v1048
  %v1070 = vmul.f32 %v1039, %v1052
  %v1071 = vmul.f32 %v1037, %v1056
  %v1072 = vmul.f32 %v1035, %v1060
  %v1073 = vpack.c.bf16 %v1069, %v1065
  %v1074 = vpack.c.bf16 %v1070, %v1066
  %v1075 = vpack.c.bf16 %v1071, %v1067
  %v1076 = vpack.c.bf16 %v1072, %v1068
  %v1081 = vunpack.c.l.b16 %v1073
  %v1082 = vunpack.c.l.b16 %v1074
  %v1083 = vunpack.c.l.b16 %v1075
  %v1084 = vunpack.c.l.b16 %v1076
  %v1085 = vunpack.c.h.b16 %v1073
  %v1086 = vunpack.c.h.b16 %v1074
  %v1087 = vunpack.c.h.b16 %v1075
  %v1088 = vunpack.c.h.b16 %v1076
  %v1089 = vpack.c.b16 %v1082, %v1081
  %v1090 = vpack.c.b16 %v1084, %v1083
  %v1091 = vpack.c.b16 %v1086, %v1085
  %v1092 = vpack.c.b16 %v1088, %v1087
  %1097 = vst [vmem:[#allocation3 + $0x60] sm:$0xff] %v1089
  %1098 = vst [vmem:[#allocation3 + $0x68] sm:$0xff] %v1090
  %1099 = vst [vmem:[#allocation3 + $0x70] sm:$0xff] %v1091
  %1100 = vst [vmem:[#allocation3 + $0x78] sm:$0xff] %v1092
  %v1101 = vpack.c.bf16 %v762, %v758
  %v1102 = vpack.c.bf16 %v763, %v759
  %v1103 = vpack.c.bf16 %v764, %v760
  %v1104 = vpack.c.bf16 %v765, %v761
  %v1109 = vunpack.c.l.b16 %v1101
  %v1110 = vunpack.c.l.b16 %v1102
  %v1111 = vunpack.c.l.b16 %v1103
  %v1112 = vunpack.c.l.b16 %v1104
  %v1113 = vunpack.c.h.b16 %v1101
  %v1114 = vunpack.c.h.b16 %v1102
  %v1115 = vunpack.c.h.b16 %v1103
  %v1116 = vunpack.c.h.b16 %v1104
  %v1117 = vpack.c.b16 %v1110, %v1109
  %v1118 = vpack.c.b16 %v1112, %v1111
  %v1119 = vpack.c.b16 %v1114, %v1113
  %v1120 = vpack.c.b16 %v1116, %v1115
  %1125 = vst [vmem:[#allocation3 + $0x80] sm:$0xff] %v1117
  %1126 = vst [vmem:[#allocation3 + $0x88] sm:$0xff] %v1118
  %1127 = vst [vmem:[#allocation3 + $0x90] sm:$0xff] %v1119
  %1128 = vst [vmem:[#allocation3 + $0x98] sm:$0xff] %v1120
  %1129 = vrot.lane.b32.xlu0 %v758, 124
  %v1130 = vpop.permute.xlu0 %1129
  %1131 = vrot.lane.b32.xlu0 %v762, 124
  %v1132 = vpop.permute.xlu0 %1131
  %1133 = vrot.lane.b32.xlu0 %v759, 124
  %v1134 = vpop.permute.xlu0 %1133
  %1135 = vrot.lane.b32.xlu0 %v763, 124
  %v1136 = vpop.permute.xlu0 %1135
  %1137 = vrot.lane.b32.xlu0 %v760, 124
  %v1138 = vpop.permute.xlu0 %1137
  %1139 = vrot.lane.b32.xlu0 %v764, 124
  %v1140 = vpop.permute.xlu0 %1139
  %1141 = vrot.lane.b32.xlu0 %v761, 124
  %v1142 = vpop.permute.xlu0 %1141
  %1143 = vrot.lane.b32.xlu0 %v765, 124
  %v1144 = vpop.permute.xlu0 %1143
  %vm1145 = vcmp.lt.s32.totalorder %v54, 124
  %v1146 = vsel %vm1145, %v1138, %v1142
  %v1147 = vsel %vm1145, %v1140, %v1144
  %v1148 = vsel %vm1145, %v1134, %v1138
  %v1149 = vsel %vm1145, %v1136, %v1140
  %v1150 = vsel %vm1145, %v1130, %v1134
  %v1151 = vsel %vm1145, %v1132, %v1136
  %v1152 = vsel %vm1145, %v1142, %v1130
  %v1153 = vsel %vm1145, %v1144, %v1132
  %s1154 = scalar_lea.vmem %s2, 5
  %v1155 = vld [vmem:[%s1154] ss:$8 sm:$0xf]
  %v1157 = vlaneseq
  %v1158 = vshrl.u32 %v1157, 7
  %v1159 = vsub.s32 0, %v1158
  %v1160 = vrot.slane %v1155, %v1159
  %v1161 = vlaneseq
  %v1162 = vshrl.u32 %v1161, 7
  %v1163 = vsub.s32 1, %v1162
  %v1164 = vrot.slane %v1155, %v1163
  %v1165 = vlaneseq
  %v1166 = vshrl.u32 %v1165, 7
  %v1167 = vsub.s32 2, %v1166
  %v1168 = vrot.slane %v1155, %v1167
  %v1169 = vlaneseq
  %v1170 = vshrl.u32 %v1169, 7
  %v1171 = vsub.s32 3, %v1170
  %v1172 = vrot.slane %v1155, %v1171
  %v1177 = vmul.f32 %v1150, %v1160
  %v1178 = vmul.f32 %v1148, %v1164
  %v1179 = vmul.f32 %v1146, %v1168
  %v1180 = vmul.f32 %v1152, %v1172
  %v1181 = vmul.f32 %v1151, %v1160
  %v1182 = vmul.f32 %v1149, %v1164
  %v1183 = vmul.f32 %v1147, %v1168
  %v1184 = vmul.f32 %v1153, %v1172
  %v1185 = vpack.c.bf16 %v1181, %v1177
  %v1186 = vpack.c.bf16 %v1182, %v1178
  %v1187 = vpack.c.bf16 %v1183, %v1179
  %v1188 = vpack.c.bf16 %v1184, %v1180
  %v1193 = vunpack.c.l.b16 %v1185
  %v1194 = vunpack.c.l.b16 %v1186
  %v1195 = vunpack.c.l.b16 %v1187
  %v1196 = vunpack.c.l.b16 %v1188
  %v1197 = vunpack.c.h.b16 %v1185
  %v1198 = vunpack.c.h.b16 %v1186
  %v1199 = vunpack.c.h.b16 %v1187
  %v1200 = vunpack.c.h.b16 %v1188
  %v1201 = vpack.c.b16 %v1194, %v1193
  %v1202 = vpack.c.b16 %v1196, %v1195
  %v1203 = vpack.c.b16 %v1198, %v1197
  %v1204 = vpack.c.b16 %v1200, %v1199
  %1209 = vst [vmem:[#allocation3 + $0xa0] sm:$0xff] %v1201
  %1210 = vst [vmem:[#allocation3 + $0xa8] sm:$0xff] %v1202
  %1211 = vst [vmem:[#allocation3 + $0xb0] sm:$0xff] %v1203
  %1212 = vst [vmem:[#allocation3 + $0xb8] sm:$0xff] %v1204
  %s1213 = scalar_lea.vmem %s2, 6
  %v1214 = vld [vmem:[%s1213] ss:$8 sm:$0xf]
  %v1216 = vlaneseq
  %v1217 = vshrl.u32 %v1216, 7
  %v1218 = vsub.s32 0, %v1217
  %v1219 = vrot.slane %v1214, %v1218
  %v1220 = vlaneseq
  %v1221 = vshrl.u32 %v1220, 7
  %v1222 = vsub.s32 1, %v1221
  %v1223 = vrot.slane %v1214, %v1222
  %v1224 = vlaneseq
  %v1225 = vshrl.u32 %v1224, 7
  %v1226 = vsub.s32 2, %v1225
  %v1227 = vrot.slane %v1214, %v1226
  %v1228 = vlaneseq
  %v1229 = vshrl.u32 %v1228, 7
  %v1230 = vsub.s32 3, %v1229
  %v1231 = vrot.slane %v1214, %v1230
  %v1236 = vmul.f32 %v787, %v1219
  %v1237 = vmul.f32 %v785, %v1223
  %v1238 = vmul.f32 %v783, %v1227
  %v1239 = vmul.f32 %v789, %v1231
  %v1240 = vmul.f32 %v788, %v1219
  %v1241 = vmul.f32 %v786, %v1223
  %v1242 = vmul.f32 %v784, %v1227
  %v1243 = vmul.f32 %v790, %v1231
  %v1244 = vpack.c.bf16 %v1240, %v1236
  %v1245 = vpack.c.bf16 %v1241, %v1237
  %v1246 = vpack.c.bf16 %v1242, %v1238
  %v1247 = vpack.c.bf16 %v1243, %v1239
  %v1252 = vunpack.c.l.b16 %v1244
  %v1253 = vunpack.c.l.b16 %v1245
  %v1254 = vunpack.c.l.b16 %v1246
  %v1255 = vunpack.c.l.b16 %v1247
  %v1256 = vunpack.c.h.b16 %v1244
  %v1257 = vunpack.c.h.b16 %v1245
  %v1258 = vunpack.c.h.b16 %v1246
  %v1259 = vunpack.c.h.b16 %v1247
  %v1260 = vpack.c.b16 %v1253, %v1252
  %v1261 = vpack.c.b16 %v1255, %v1254
  %v1262 = vpack.c.b16 %v1257, %v1256
  %v1263 = vpack.c.b16 %v1259, %v1258
  %1268 = vst [vmem:[#allocation3 + $0xc0] sm:$0xff] %v1260
  %1269 = vst [vmem:[#allocation3 + $0xc8] sm:$0xff] %v1261
  %1270 = vst [vmem:[#allocation3 + $0xd0] sm:$0xff] %v1262
  %1271 = vst [vmem:[#allocation3 + $0xd8] sm:$0xff] %v1263
  %s1272 = scalar_lea.vmem %s2, 7
  %v1273 = vld [vmem:[%s1272] ss:$8 sm:$0xf]
  %v1275 = vlaneseq
  %v1276 = vshrl.u32 %v1275, 7
  %v1277 = vsub.s32 0, %v1276
  %v1278 = vrot.slane %v1273, %v1277
  %v1279 = vlaneseq
  %v1280 = vshrl.u32 %v1279, 7
  %v1281 = vsub.s32 1, %v1280
  %v1282 = vrot.slane %v1273, %v1281
  %v1283 = vlaneseq
  %v1284 = vshrl.u32 %v1283, 7
  %v1285 = vsub.s32 2, %v1284
  %v1286 = vrot.slane %v1273, %v1285
  %v1287 = vlaneseq
  %v1288 = vshrl.u32 %v1287, 7
  %v1289 = vsub.s32 3, %v1288
  %v1290 = vrot.slane %v1273, %v1289
  %v1295 = vmul.f32 %v870, %v1278
  %v1296 = vmul.f32 %v868, %v1282
  %v1297 = vmul.f32 %v866, %v1286
  %v1298 = vmul.f32 %v872, %v1290
  %v1299 = vmul.f32 %v871, %v1278
  %v1300 = vmul.f32 %v869, %v1282
  %v1301 = vmul.f32 %v867, %v1286
  %v1302 = vmul.f32 %v873, %v1290
  %v1303 = vpack.c.bf16 %v1299, %v1295
  %v1304 = vpack.c.bf16 %v1300, %v1296
  %v1305 = vpack.c.bf16 %v1301, %v1297
  %v1306 = vpack.c.bf16 %v1302, %v1298
  %v1311 = vunpack.c.l.b16 %v1303
  %v1312 = vunpack.c.l.b16 %v1304
  %v1313 = vunpack.c.l.b16 %v1305
  %v1314 = vunpack.c.l.b16 %v1306
  %v1315 = vunpack.c.h.b16 %v1303
  %v1316 = vunpack.c.h.b16 %v1304
  %v1317 = vunpack.c.h.b16 %v1305
  %v1318 = vunpack.c.h.b16 %v1306
  %v1319 = vpack.c.b16 %v1312, %v1311
  %v1320 = vpack.c.b16 %v1314, %v1313
  %v1321 = vpack.c.b16 %v1316, %v1315
  %v1322 = vpack.c.b16 %v1318, %v1317
  %1327 = vst [vmem:[#allocation3 + $0xe0] sm:$0xff] %v1319
  %1328 = vst [vmem:[#allocation3 + $0xe8] sm:$0xff] %v1320
  %1329 = vst [vmem:[#allocation3 + $0xf0] sm:$0xff] %v1321
  %1330 = vst [vmem:[#allocation3 + $0xf8] sm:$0xff] %v1322
  %s1331 = scalar_lea.vmem %s2, 32
  %v1332 = vld [vmem:[%s1331] ss:$8 sm:$0xf]
  %v1334 = vlaneseq
  %v1335 = vshrl.u32 %v1334, 7
  %v1336 = vsub.s32 0, %v1335
  %v1337 = vrot.slane %v1332, %v1336
  %v1338 = vlaneseq
  %v1339 = vshrl.u32 %v1338, 7
  %v1340 = vsub.s32 1, %v1339
  %v1341 = vrot.slane %v1332, %v1340
  %v1342 = vlaneseq
  %v1343 = vshrl.u32 %v1342, 7
  %v1344 = vsub.s32 2, %v1343
  %v1345 = vrot.slane %v1332, %v1344
  %v1346 = vlaneseq
  %v1347 = vshrl.u32 %v1346, 7
  %v1348 = vsub.s32 3, %v1347
  %v1349 = vrot.slane %v1332, %v1348
  %v1354 = vmul.f32 %v954, %v1337
  %v1355 = vmul.f32 %v952, %v1341
  %v1356 = vmul.f32 %v950, %v1345
  %v1357 = vmul.f32 %v956, %v1349
  %v1358 = vmul.f32 %v955, %v1337
  %v1359 = vmul.f32 %v953, %v1341
  %v1360 = vmul.f32 %v951, %v1345
  %v1361 = vmul.f32 %v957, %v1349
  %v1362 = vpack.c.bf16 %v1358, %v1354
  %v1363 = vpack.c.bf16 %v1359, %v1355
  %v1364 = vpack.c.bf16 %v1360, %v1356
  %v1365 = vpack.c.bf16 %v1361, %v1357
  %v1370 = vunpack.c.l.b16 %v1362
  %v1371 = vunpack.c.l.b16 %v1363
  %v1372 = vunpack.c.l.b16 %v1364
  %v1373 = vunpack.c.l.b16 %v1365
  %v1374 = vunpack.c.h.b16 %v1362
  %v1375 = vunpack.c.h.b16 %v1363
  %v1376 = vunpack.c.h.b16 %v1364
  %v1377 = vunpack.c.h.b16 %v1365
  %v1378 = vpack.c.b16 %v1371, %v1370
  %v1379 = vpack.c.b16 %v1373, %v1372
  %v1380 = vpack.c.b16 %v1375, %v1374
  %v1381 = vpack.c.b16 %v1377, %v1376
  %1386 = vst [vmem:[#allocation3 + $0x100] sm:$0xff] %v1378
  %1387 = vst [vmem:[#allocation3 + $0x108] sm:$0xff] %v1379
  %1388 = vst [vmem:[#allocation3 + $0x110] sm:$0xff] %v1380
  %1389 = vst [vmem:[#allocation3 + $0x118] sm:$0xff] %v1381
  %v1390 = vld [vmem:[%s5] sm:$0xff]
  %v1391 = vld [vmem:[%s5 + $0x8] sm:$0xff]
  %v1392 = vld [vmem:[#allocation3] sm:$0xff]
  %v1393 = vld [vmem:[#allocation3 + $0x8] sm:$0xff]
  %v1394 = vld [vmem:[#allocation3 + $0x10] sm:$0xff]
  %v1395 = vld [vmem:[#allocation3 + $0x18] sm:$0xff]
  %v1396 = vld [vmem:[#allocation3 + $0x20] sm:$0xff]
  %v1397 = vld [vmem:[#allocation3 + $0x28] sm:$0xff]
  %v1398 = vld [vmem:[#allocation3 + $0x30] sm:$0xff]
  %v1399 = vld [vmem:[#allocation3 + $0x38] sm:$0xff]
  %v1400 = vld [vmem:[#allocation3 + $0x40] sm:$0xff]
  %v1401 = vld [vmem:[#allocation3 + $0x48] sm:$0xff]
  %v1402 = vld [vmem:[#allocation3 + $0x50] sm:$0xff]
  %v1403 = vld [vmem:[#allocation3 + $0x58] sm:$0xff]
  %v1404 = vld [vmem:[#allocation3 + $0x60] sm:$0xff]
  %v1405 = vld [vmem:[#allocation3 + $0x68] sm:$0xff]
  %v1406 = vld [vmem:[#allocation3 + $0x70] sm:$0xff]
  %v1407 = vld [vmem:[#allocation3 + $0x78] sm:$0xff]
  %v1408 = vld [vmem:[#allocation3 + $0x80] sm:$0xff]
  %v1409 = vld [vmem:[#allocation3 + $0x88] sm:$0xff]
  %v1410 = vld [vmem:[#allocation3 + $0x90] sm:$0xff]
  %v1411 = vld [vmem:[#allocation3 + $0x98] sm:$0xff]
  %v1412 = vld [vmem:[#allocation3 + $0xa0] sm:$0xff]
  %v1413 = vld [vmem:[#allocation3 + $0xa8] sm:$0xff]
  %v1414 = vld [vmem:[#allocation3 + $0xb0] sm:$0xff]
  %v1415 = vld [vmem:[#allocation3 + $0xb8] sm:$0xff]
  %v1416 = vld [vmem:[#allocation3 + $0xc0] sm:$0xff]
  %v1417 = vld [vmem:[#allocation3 + $0xc8] sm:$0xff]
  %v1418 = vld [vmem:[#allocation3 + $0xd0] sm:$0xff]
  %v1419 = vld [vmem:[#allocation3 + $0xd8] sm:$0xff]
  %v1420 = vld [vmem:[#allocation3 + $0xe0] sm:$0xff]
  %v1421 = vld [vmem:[#allocation3 + $0xe8] sm:$0xff]
  %v1422 = vld [vmem:[#allocation3 + $0xf0] sm:$0xff]
  %v1423 = vld [vmem:[#allocation3 + $0xf8] sm:$0xff]
  %v1424 = vld [vmem:[#allocation3 + $0x100] sm:$0xff]
  %v1425 = vld [vmem:[#allocation3 + $0x108] sm:$0xff]
  %v1426 = vld [vmem:[#allocation3 + $0x110] sm:$0xff]
  %v1427 = vld [vmem:[#allocation3 + $0x118] sm:$0xff]
  %v1428 = vld [vmem:[%s6] sm:$0xff]
  %v1429 = vld [vmem:[%s6 + $0x8] sm:$0xff]
  %1431 = vset.pattern.permute.xlu0 0
  %1432 = vperm.xlu0 %1431, %v1428
  %v1433 = vpop.permute.xlu0 %1432
  %1436 = vset.pattern.permute.xlu0 0
  %1437 = vperm.xlu0 %1436, %v1429
  %v1438 = vpop.permute.xlu0 %1437
  %v1442 = vunpack.c.l.b16 %v1390
  %v1443 = vunpack.c.h.b16 %v1390
  %v1444 = vunpack.c.l.b16 %v1391
  %v1445 = vunpack.c.h.b16 %v1391
  %v1446 = vpack.c.b16 %v1444, %v1442
  %v1447 = vpack.c.b16 %v1445, %v1443
  %v1485 = vunpack.c.l.b16 %v1392
  %v1486 = vunpack.c.h.b16 %v1392
  %v1487 = vunpack.c.l.b16 %v1393
  %v1488 = vunpack.c.h.b16 %v1393
  %v1489 = vunpack.c.l.b16 %v1394
  %v1490 = vunpack.c.h.b16 %v1394
  %v1491 = vunpack.c.l.b16 %v1395
  %v1492 = vunpack.c.h.b16 %v1395
  %v1493 = vunpack.c.l.b16 %v1396
  %v1494 = vunpack.c.h.b16 %v1396
  %v1495 = vunpack.c.l.b16 %v1397
  %v1496 = vunpack.c.h.b16 %v1397
  %v1497 = vunpack.c.l.b16 %v1398
  %v1498 = vunpack.c.h.b16 %v1398
  %v1499 = vunpack.c.l.b16 %v1399
  %v1500 = vunpack.c.h.b16 %v1399
  %v1501 = vunpack.c.l.b16 %v1400
  %v1502 = vunpack.c.h.b16 %v1400
  %v1503 = vunpack.c.l.b16 %v1401
  %v1504 = vunpack.c.h.b16 %v1401
  %v1505 = vunpack.c.l.b16 %v1402
  %v1506 = vunpack.c.h.b16 %v1402
  %v1507 = vunpack.c.l.b16 %v1403
  %v1508 = vunpack.c.h.b16 %v1403
  %v1509 = vunpack.c.l.b16 %v1404
  %v1510 = vunpack.c.h.b16 %v1404
  %v1511 = vunpack.c.l.b16 %v1405
  %v1512 = vunpack.c.h.b16 %v1405
  %v1513 = vunpack.c.l.b16 %v1406
  %v1514 = vunpack.c.h.b16 %v1406
  %v1515 = vunpack.c.l.b16 %v1407
  %v1516 = vunpack.c.h.b16 %v1407
  %v1517 = vunpack.c.l.b16 %v1408
  %v1518 = vunpack.c.h.b16 %v1408
  %v1519 = vunpack.c.l.b16 %v1409
  %v1520 = vunpack.c.h.b16 %v1409
  %v1521 = vunpack.c.l.b16 %v1410
  %v1522 = vunpack.c.h.b16 %v1410
  %v1523 = vunpack.c.l.b16 %v1411
  %v1524 = vunpack.c.h.b16 %v1411
  %v1525 = vunpack.c.l.b16 %v1412
  %v1526 = vunpack.c.h.b16 %v1412
  %v1527 = vunpack.c.l.b16 %v1413
  %v1528 = vunpack.c.h.b16 %v1413
  %v1529 = vunpack.c.l.b16 %v1414
  %v1530 = vunpack.c.h.b16 %v1414
  %v1531 = vunpack.c.l.b16 %v1415
  %v1532 = vunpack.c.h.b16 %v1415
  %v1533 = vunpack.c.l.b16 %v1416
  %v1534 = vunpack.c.h.b16 %v1416
  %v1535 = vunpack.c.l.b16 %v1417
  %v1536 = vunpack.c.h.b16 %v1417
  %v1537 = vunpack.c.l.b16 %v1418
  %v1538 = vunpack.c.h.b16 %v1418
  %v1539 = vunpack.c.l.b16 %v1419
  %v1540 = vunpack.c.h.b16 %v1419
  %v1541 = vunpack.c.l.b16 %v1420
  %v1542 = vunpack.c.h.b16 %v1420
  %v1543 = vunpack.c.l.b16 %v1421
  %v1544 = vunpack.c.h.b16 %v1421
  %v1545 = vunpack.c.l.b16 %v1422
  %v1546 = vunpack.c.h.b16 %v1422
  %v1547 = vunpack.c.l.b16 %v1423
  %v1548 = vunpack.c.h.b16 %v1423
  %v1549 = vunpack.c.l.b16 %v1424
  %v1550 = vunpack.c.h.b16 %v1424
  %v1551 = vunpack.c.l.b16 %v1425
  %v1552 = vunpack.c.h.b16 %v1425
  %v1553 = vunpack.c.l.b16 %v1426
  %v1554 = vunpack.c.h.b16 %v1426
  %v1555 = vunpack.c.l.b16 %v1427
  %v1556 = vunpack.c.h.b16 %v1427
  %v1557 = vpack.c.b16 %v1489, %v1485
  %v1558 = vpack.c.b16 %v1490, %v1486
  %v1559 = vpack.c.b16 %v1491, %v1487
  %v1560 = vpack.c.b16 %v1492, %v1488
  %v1561 = vpack.c.b16 %v1497, %v1493
  %v1562 = vpack.c.b16 %v1498, %v1494
  %v1563 = vpack.c.b16 %v1499, %v1495
  %v1564 = vpack.c.b16 %v1500, %v1496
  %v1565 = vpack.c.b16 %v1505, %v1501
  %v1566 = vpack.c.b16 %v1506, %v1502
  %v1567 = vpack.c.b16 %v1507, %v1503
  %v1568 = vpack.c.b16 %v1508, %v1504
  %v1569 = vpack.c.b16 %v1513, %v1509
  %v1570 = vpack.c.b16 %v1514, %v1510
  %v1571 = vpack.c.b16 %v1515, %v1511
  %v1572 = vpack.c.b16 %v1516, %v1512
  %v1573 = vpack.c.b16 %v1521, %v1517
  %v1574 = vpack.c.b16 %v1522, %v1518
  %v1575 = vpack.c.b16 %v1523, %v1519
  %v1576 = vpack.c.b16 %v1524, %v1520
  %v1577 = vpack.c.b16 %v1529, %v1525
  %v1578 = vpack.c.b16 %v1530, %v1526
  %v1579 = vpack.c.b16 %v1531, %v1527
  %v1580 = vpack.c.b16 %v1532, %v1528
  %v1581 = vpack.c.b16 %v1537, %v1533
  %v1582 = vpack.c.b16 %v1538, %v1534
  %v1583 = vpack.c.b16 %v1539, %v1535
  %v1584 = vpack.c.b16 %v1540, %v1536
  %v1585 = vpack.c.b16 %v1545, %v1541
  %v1586 = vpack.c.b16 %v1546, %v1542
  %v1587 = vpack.c.b16 %v1547, %v1543
  %v1588 = vpack.c.b16 %v1548, %v1544
  %v1589 = vpack.c.b16 %v1553, %v1549
  %v1590 = vpack.c.b16 %v1554, %v1550
  %v1591 = vpack.c.b16 %v1555, %v1551
  %v1592 = vpack.c.b16 %v1556, %v1552
  %vm1629 = vcmask 130048
  %v1631 = vsel %vm1629, %v1447, 0
  %1633 = vmatprep.subr.bf16.mxu0 %v1586
  %1634 = vmatpush1.bf16.msra.mxu0 %v1585
  %1635 = vmatprep.subr.bf16.mxu0 %v1582
  %1636 = vmatpush1.bf16.msra.mxu0 %v1581
  %1637 = vmatprep.subr.bf16.mxu0 %v1578
  %1638 = vmatpush1.bf16.msra.mxu0 %v1577
  %1639 = vmatprep.subr.bf16.mxu0 %v1574
  %1640 = vmatpush1.bf16.msra.mxu0 %v1573
  %1641 = vmatprep.subr.bf16.mxu0 %v1570
  %1642 = vmatpush1.bf16.msra.mxu0 %v1569
  %1643 = vmatprep.subr.bf16.mxu0 %v1566
  %1644 = vmatpush1.bf16.msra.mxu0 %v1565
  %1645 = vmatprep.subr.bf16.mxu0 %v1562
  %1646 = vmatpush1.bf16.msra.mxu0 %v1561
  %1647 = vmatprep.subr.bf16.mxu0 %v1558
  %1648 = vmatpush1.bf16.msra.mxu0 %v1557
  %1649 = vmatprep.subr.bf16.mxu0 0
  %1650 = vmatpush2.bf16.msra.mxu0 0
  %1651 = vmatprep.subr.bf16.mxu0 0
  %1652 = vmatpush2.bf16.msra.mxu0 0
  %1653 = vmatprep.subr.bf16.mxu0 0
  %1654 = vmatpush2.bf16.msra.mxu0 0
  %1655 = vmatprep.subr.bf16.mxu0 0
  %1656 = vmatpush2.bf16.msra.mxu0 0
  %1657 = vmatprep.subr.bf16.mxu0 0
  %1658 = vmatpush2.bf16.msra.mxu0 0
  %1659 = vmatprep.subr.bf16.mxu0 0
  %1660 = vmatpush2.bf16.msra.mxu0 0
  %1661 = vmatprep.subr.bf16.mxu0 0
  %1662 = vmatpush2.bf16.msra.mxu0 0
  %1663 = vmatprep.subr.bf16.mxu0 %v1590
  %1664 = vmatpush2.bf16.msra.mxu0 %v1589
  %1665 = vmatprep.mubr.bf16.mxu0 %v1631
  %1666 = vmatmul.mubr.bf16.gmra.mxu0 %v1446
  %v1667 = vpop.f32.mrf.mxu0
  %v1668 = vadd.f32 %v1433, %v1667
  %v1669 = vpop.f32.mrf.mxu0
  %v1670 = vadd.f32 %v1433, %v1669
  %v1671 = vpop.f32.mrf.mxu0
  %v1672 = vadd.f32 %v1438, %v1671
  %v1673 = vpop.f32.mrf.mxu0
  %v1674 = vadd.f32 %v1438, %v1673
  %1675 = vdwg.mxu0
  %1676 = vmatprep.subr.bf16.mxu0 %v1588
  %1677 = vmatpush1.bf16.msra.mxu0 %v1587
  %1678 = vmatprep.subr.bf16.mxu0 %v1584
  %1679 = vmatpush1.bf16.msra.mxu0 %v1583
  %1680 = vmatprep.subr.bf16.mxu0 %v1580
  %1681 = vmatpush1.bf16.msra.mxu0 %v1579
  %1682 = vmatprep.subr.bf16.mxu0 %v1576
  %1683 = vmatpush1.bf16.msra.mxu0 %v1575
  %1684 = vmatprep.subr.bf16.mxu0 %v1572
  %1685 = vmatpush1.bf16.msra.mxu0 %v1571
  %1686 = vmatprep.subr.bf16.mxu0 %v1568
  %1687 = vmatpush1.bf16.msra.mxu0 %v1567
  %1688 = vmatprep.subr.bf16.mxu0 %v1564
  %1689 = vmatpush1.bf16.msra.mxu0 %v1563
  %1690 = vmatprep.subr.bf16.mxu0 %v1560
  %1691 = vmatpush1.bf16.msra.mxu0 %v1559
  %1692 = vmatprep.subr.bf16.mxu0 0
  %1693 = vmatpush2.bf16.msra.mxu0 0
  %1694 = vmatprep.subr.bf16.mxu0 0
  %1695 = vmatpush2.bf16.msra.mxu0 0
  %1696 = vmatprep.subr.bf16.mxu0 0
  %1697 = vmatpush2.bf16.msra.mxu0 0
  %1698 = vmatprep.subr.bf16.mxu0 0
  %1699 = vmatpush2.bf16.msra.mxu0 0
  %1700 = vmatprep.subr.bf16.mxu0 0
  %1701 = vmatpush2.bf16.msra.mxu0 0
  %1702 = vmatprep.subr.bf16.mxu0 0
  %1703 = vmatpush2.bf16.msra.mxu0 0
  %1704 = vmatprep.subr.bf16.mxu0 0
  %1705 = vmatpush2.bf16.msra.mxu0 0
  %1706 = vmatprep.subr.bf16.mxu0 %v1592
  %1707 = vmatpush2.bf16.msra.mxu0 %v1591
  %1708 = vmatprep.mubr.bf16.mxu0 %v1631
  %1709 = vmatmul.mubr.bf16.gmra.mxu0 %v1446
  %v1710 = vpop.f32.mrf.mxu0
  %v1711 = vadd.f32 %v1433, %v1710
  %v1712 = vpop.f32.mrf.mxu0
  %v1713 = vadd.f32 %v1433, %v1712
  %v1714 = vpop.f32.mrf.mxu0
  %v1715 = vadd.f32 %v1438, %v1714
  %v1716 = vpop.f32.mrf.mxu0
  %v1717 = vadd.f32 %v1438, %v1716
  %1718 = vdwg.mxu0
  %v1719 = vmax.f32 %v1668, 0.0
  %v1720 = vmax.f32 %v1670, 0.0
  %v1721 = vmax.f32 %v1711, 0.0
  %v1722 = vmax.f32 %v1713, 0.0
  %v1723 = vmax.f32 %v1672, 0.0
  %v1724 = vmax.f32 %v1674, 0.0
  %v1725 = vmax.f32 %v1715, 0.0
  %v1726 = vmax.f32 %v1717, 0.0
  %v1727 = vld [vmem:[%s7] sm:$0xff]
  %v1728 = vld [vmem:[%s7 + $0x8] sm:$0xff]
  %1730 = vset.pattern.permute.xlu0 0
  %1731 = vperm.xlu0 %1730, %v1727
  %v1732 = vpop.permute.xlu0 %1731
  %1735 = vset.pattern.permute.xlu0 0
  %1736 = vperm.xlu0 %1735, %v1728
  %v1737 = vpop.permute.xlu0 %1736
  %v1739 = vmul.f32 %v1719, %v1732
  %v1740 = vmul.f32 %v1720, %v1732
  %v1741 = vmul.f32 %v1721, %v1732
  %v1742 = vmul.f32 %v1722, %v1732
  %v1743 = vmul.f32 %v1723, %v1737
  %v1744 = vmul.f32 %v1724, %v1737
  %v1745 = vmul.f32 %v1725, %v1737
  %v1746 = vmul.f32 %v1726, %v1737
  %v1747 = vadd.f32 %v1739, %v1743
  %v1748 = vrot.slane %v1747, 4
  %v1749 = vadd.f32 %v1747, %v1748
  %v1750 = vrot.slane %v1749, 2
  %v1751 = vadd.f32 %v1749, %v1750
  %v1752 = vrot.slane %v1751, 1
  %v1753 = vadd.f32 %v1751, %v1752
  %v1754 = vadd.f32 %v1740, %v1744
  %v1755 = vrot.slane %v1754, 4
  %v1756 = vadd.f32 %v1754, %v1755
  %v1757 = vrot.slane %v1756, 2
  %v1758 = vadd.f32 %v1756, %v1757
  %v1759 = vrot.slane %v1758, 1
  %v1760 = vadd.f32 %v1758, %v1759
  %v1761 = vadd.f32 %v1741, %v1745
  %v1762 = vrot.slane %v1761, 4
  %v1763 = vadd.f32 %v1761, %v1762
  %v1764 = vrot.slane %v1763, 2
  %v1765 = vadd.f32 %v1763, %v1764
  %v1766 = vrot.slane %v1765, 1
  %v1767 = vadd.f32 %v1765, %v1766
  %v1768 = vadd.f32 %v1742, %v1746
  %v1769 = vrot.slane %v1768, 4
  %v1770 = vadd.f32 %v1768, %v1769
  %v1771 = vrot.slane %v1770, 2
  %v1772 = vadd.f32 %v1770, %v1771
  %v1773 = vrot.slane %v1772, 1
  %v1774 = vadd.f32 %v1772, %v1773
  %v1775 = vld [vmem:[%s8] sm:$0x1]
  %1777 = vset.pattern.permute.xlu0 0
  %1778 = vperm.xlu0 %1777, %v1775
  %v1779 = vpop.permute.xlu0 %1778
  %v1781 = vadd.f32 %v1753, %v1779
  %v1782 = vadd.f32 %v1760, %v1779
  %v1783 = vadd.f32 %v1767, %v1779
  %v1784 = vadd.f32 %v1774, %v1779
  %v1785 = vmax.f32 %v1781, 0.0
  %v1786 = vmax.f32 %v1782, 0.0
  %v1787 = vmax.f32 %v1783, 0.0
  %v1788 = vmax.f32 %v1784, 0.0
  %v1789 = vld [vmem:[%s9] sm:$0x1]
  %1791 = vset.pattern.permute.xlu0 0
  %1792 = vperm.xlu0 %1791, %v1789
  %v1793 = vpop.permute.xlu0 %1792
  %v1795 = vmul.f32 %v1785, %v1793
  %v1796 = vmul.f32 %v1786, %v1793
  %v1797 = vmul.f32 %v1787, %v1793
  %v1798 = vmul.f32 %v1788, %v1793
  %1799 = vset.pattern.permute.xlu0 1
  %1800 = vperm.xlu0 %1799, %v1727
  %v1801 = vpop.permute.xlu0 %1800
  %1803 = vset.pattern.permute.xlu0 1
  %1804 = vperm.xlu0 %1803, %v1728
  %v1805 = vpop.permute.xlu0 %1804
  %v1807 = vmul.f32 %v1719, %v1801
  %v1808 = vmul.f32 %v1720, %v1801
  %v1809 = vmul.f32 %v1721, %v1801
  %v1810 = vmul.f32 %v1722, %v1801
  %v1811 = vmul.f32 %v1723, %v1805
  %v1812 = vmul.f32 %v1724, %v1805
  %v1813 = vmul.f32 %v1725, %v1805
  %v1814 = vmul.f32 %v1726, %v1805
  %v1815 = vadd.f32 %v1807, %v1811
  %v1816 = vrot.slane %v1815, 4
  %v1817 = vadd.f32 %v1815, %v1816
  %v1818 = vrot.slane %v1817, 2
  %v1819 = vadd.f32 %v1817, %v1818
  %v1820 = vrot.slane %v1819, 1
  %v1821 = vadd.f32 %v1819, %v1820
  %v1822 = vadd.f32 %v1808, %v1812
  %v1823 = vrot.slane %v1822, 4
  %v1824 = vadd.f32 %v1822, %v1823
  %v1825 = vrot.slane %v1824, 2
  %v1826 = vadd.f32 %v1824, %v1825
  %v1827 = vrot.slane %v1826, 1
  %v1828 = vadd.f32 %v1826, %v1827
  %v1829 = vadd.f32 %v1809, %v1813
  %v1830 = vrot.slane %v1829, 4
  %v1831 = vadd.f32 %v1829, %v1830
  %v1832 = vrot.slane %v1831, 2
  %v1833 = vadd.f32 %v1831, %v1832
  %v1834 = vrot.slane %v1833, 1
  %v1835 = vadd.f32 %v1833, %v1834
  %v1836 = vadd.f32 %v1810, %v1814
  %v1837 = vrot.slane %v1836, 4
  %v1838 = vadd.f32 %v1836, %v1837
  %v1839 = vrot.slane %v1838, 2
  %v1840 = vadd.f32 %v1838, %v1839
  %v1841 = vrot.slane %v1840, 1
  %v1842 = vadd.f32 %v1840, %v1841
  %v1843 = vld [vmem:[%s8 + $0x1] sm:$0x1]
  %1845 = vset.pattern.permute.xlu0 0
  %1846 = vperm.xlu0 %1845, %v1843
  %v1847 = vpop.permute.xlu0 %1846
  %v1849 = vadd.f32 %v1821, %v1847
  %v1850 = vadd.f32 %v1828, %v1847
  %v1851 = vadd.f32 %v1835, %v1847
  %v1852 = vadd.f32 %v1842, %v1847
  %v1853 = vmax.f32 %v1849, 0.0
  %v1854 = vmax.f32 %v1850, 0.0
  %v1855 = vmax.f32 %v1851, 0.0
  %v1856 = vmax.f32 %v1852, 0.0
  %v1857 = vld [vmem:[%s9 + $0x1] sm:$0x1]
  %1859 = vset.pattern.permute.xlu0 0
  %1860 = vperm.xlu0 %1859, %v1857
  %v1861 = vpop.permute.xlu0 %1860
  %v1863 = vmul.f32 %v1853, %v1861
  %v1864 = vmul.f32 %v1854, %v1861
  %v1865 = vmul.f32 %v1855, %v1861
  %v1866 = vmul.f32 %v1856, %v1861
  %v1867 = vadd.f32 %v1795, %v1863
  %v1868 = vadd.f32 %v1796, %v1864
  %v1869 = vadd.f32 %v1797, %v1865
  %v1870 = vadd.f32 %v1798, %v1866
  %v1871 = vld [vmem:[#allocation4] sm:$0x1]
  %1873 = vset.pattern.permute.xlu0 0
  %1874 = vperm.xlu0 %1873, %v1871
  %v1875 = vpop.permute.xlu0 %1874
  %v1877 = vlaneseq
  %v1878 = vshrl.u32 %v1877, 7
  %v1879 = vsub.s32 0, %v1878
  %v1880 = vrot.slane %v1875, %v1879
  %v1881 = vadd.f32 %v1867, %v1880
  %v1882 = vadd.f32 %v1868, %v1880
  %v1883 = vadd.f32 %v1869, %v1880
  %v1884 = vadd.f32 %v1870, %v1880
  %v1885 = vxor.u32 %v1881, 2147483648
  %v1886 = vxor.u32 %v1882, 2147483648
  %v1887 = vxor.u32 %v1883, 2147483648
  %v1888 = vxor.u32 %v1884, 2147483648
  %v1889 = vmul.f32 %v1885, 1.442695
  %v1890 = vpow.pop %v1889
  %v1891 = vmul.f32 %v1886, 1.442695
  %v1892 = vpow.pop %v1891
  %v1893 = vmul.f32 %v1887, 1.442695
  %v1894 = vpow.pop %v1893
  %v1895 = vmul.f32 %v1888, 1.442695
  %v1896 = vpow.pop %v1895
  %v1897 = vadd.f32 %v1890, 1.0
  %v1898 = vadd.f32 %v1892, 1.0
  %v1899 = vadd.f32 %v1894, 1.0
  %v1900 = vadd.f32 %v1896, 1.0
  %v1901 = vrcp.pop %v1897
  %v1902 = vmul.f32 1.0, %v1901
  %v1903 = vrcp.pop %v1898
  %v1904 = vmul.f32 1.0, %v1903
  %v1905 = vrcp.pop %v1899
  %v1906 = vmul.f32 1.0, %v1905
  %v1907 = vrcp.pop %v1900
  %v1908 = vmul.f32 1.0, %v1907
  %v1909 = vlaneseq
  %v1910 = vshrl.u32 %v1909, 7
  %v1911 = vsub.s32 0, %v1910
  %v1912 = vrot.slane %v1902, %v1911
  %v1913 = vlaneseq
  %v1914 = vshrl.u32 %v1913, 7
  %v1915 = vsub.s32 0, %v1914
  %v1916 = vrot.slane %v1904, %v1915
  %v1917 = vlaneseq
  %v1918 = vshrl.u32 %v1917, 7
  %v1919 = vsub.s32 0, %v1918
  %v1920 = vrot.slane %v1906, %v1919
  %v1921 = vlaneseq
  %v1922 = vshrl.u32 %v1921, 7
  %v1923 = vsub.s32 0, %v1922
  %v1924 = vrot.slane %v1908, %v1923
  %v1925 = vmul.f32 %v1719, %v1912
  %v1926 = vmul.f32 %v1720, %v1916
  %v1927 = vmul.f32 %v1721, %v1920
  %v1928 = vmul.f32 %v1722, %v1924
  %v1929 = vmul.f32 %v1723, %v1912
  %v1930 = vmul.f32 %v1724, %v1916
  %v1931 = vmul.f32 %v1725, %v1920
  %v1932 = vmul.f32 %v1726, %v1924
  %1933 = vst [vmem:[%s11] sm:$0xff] %v1925
  %1934 = vst [vmem:[%s11 + $0x8] sm:$0xff] %v1926
  %1935 = vst [vmem:[%s11 + $0x10] sm:$0xff] %v1927
  %1936 = vst [vmem:[%s11 + $0x18] sm:$0xff] %v1928
  %1937 = vst [vmem:[%s11 + $0x20] sm:$0xff] %v1929
  %1938 = vst [vmem:[%s11 + $0x28] sm:$0xff] %v1930
  %1939 = vst [vmem:[%s11 + $0x30] sm:$0xff] %v1931
  %1940 = vst [vmem:[%s11 + $0x38] sm:$0xff] %v1932
  // Predicated region
  $region46: #{dilated_bottleneck_pallas.1} parent=0 // pred_check
    _
  $region47: #{dilated_bottleneck_pallas.1} parent=0 // pred_check_branch
    %1942 = sbr.rel (0) target = $region49
  $region48: #{dilated_bottleneck_pallas.1} parent=0 // pred_region
    _
  $region49: #{dilated_bottleneck_pallas.1} parent=0 // pred_fallthru
    _
  // Predicated region
  $region50: #{dilated_bottleneck_pallas.1} parent=0 // pred_check
    _
  $region51: #{dilated_bottleneck_pallas.1} parent=0 // pred_check_branch
    %1944 = sbr.rel (0) target = $region53
  $region52: #{dilated_bottleneck_pallas.1} parent=0 // pred_region
    _
  $region53: #{dilated_bottleneck_pallas.1} parent=0 // pred_fallthru
    _

</llo_original>
